<compile_context>
chip_gen: v7x
topology: tpu7x:2x2x1
jax: 0.10.0
libtpu: 0.0.40
codegen_flags: <defaults>
</compile_context>

<pallas_src>
import jax
import jax.numpy as jnp
from jax.experimental import pallas as pl
from jax.experimental.pallas import tpu as pltpu

LANE = 128
INPUT_SZ = 32 * 32 * 3


def mlp_kernel(x_ref, w1_ref, b1_ref, w2_ref, b2_ref, w3_ref, b3_ref,
               w4_ref, b4_ref, o_ref):
    # Layer 1: Linear(input_sz, hidden*2) + ReLU  (bf16 operands, f32 accum)
    h = jnp.dot(x_ref[...], w1_ref[...], preferred_element_type=jnp.float32)
    h = jnp.maximum(h + b1_ref[...], 0.0)
    # Layer 2: Linear(hidden*2, hidden) + ReLU
    h = jnp.dot(h.astype(w2_ref.dtype), w2_ref[...],
                preferred_element_type=jnp.float32)
    h = jnp.maximum(h + b2_ref[...], 0.0)
    # Layer 3: Linear(hidden, hidden//2) + ReLU
    h = jnp.dot(h.astype(w3_ref.dtype), w3_ref[...],
                preferred_element_type=jnp.float32)
    h = jnp.maximum(h + b3_ref[...], 0.0)
    # Layer 4: Linear(hidden//2, n_classes) lane-padded to 128 (no activation)
    o = jnp.dot(h.astype(w4_ref.dtype), w4_ref[...],
                preferred_element_type=jnp.float32)
    o_ref[...] = o + b4_ref[...]


def _round_up(x, m):
    return (x + m - 1) // m * m


def base_model_forward(x_nchw, params, *, tb_max=512):
    """Forward pass of BaseModel. x_nchw: (B, 3, 32, 32) float32."""
    B = x_nchw.shape[0]
    # glue: flatten exactly like torch's input.view(-1, 32*32*3)
    x = x_nchw.reshape(-1, INPUT_SZ)

    w1, b1, w2, b2, w3, b3, w4, b4 = params
    n_classes = w4.shape[1]
    n_pad = _round_up(n_classes, LANE)

    # Lane-pad the last layer so the output store is a dense 128-lane slab.
    w4p = jnp.zeros((w4.shape[0], n_pad), w4.dtype).at[:, :n_classes].set(w4)
    b4p = jnp.zeros((1, n_pad), b4.dtype).at[:, :n_classes].set(b4)

    # Batch tiling: tile sublane dim must be a multiple of 8; pad B as needed.
    tb = min(tb_max, _round_up(B, 8))
    B_pad = _round_up(B, tb)
    if B_pad != B:
        x = jnp.pad(x, ((0, B_pad - B), (0, 0)))
    grid = (B_pad // tb,)

    # bf16 on the HBM-heavy operands; biases stay f32 (added to f32 accum).
    xb = x.astype(jnp.bfloat16)
    w1b = w1.astype(jnp.bfloat16)
    w2b = w2.astype(jnp.bfloat16)
    w3b = w3.astype(jnp.bfloat16)
    w4b = w4p.astype(jnp.bfloat16)

    const = lambda i: (0, 0)   # weights/biases: same block every step -> resident
    weight_specs = [
        pl.BlockSpec(w1b.shape, const), pl.BlockSpec(b1.shape, const),
        pl.BlockSpec(w2b.shape, const), pl.BlockSpec(b2.shape, const),
        pl.BlockSpec(w3b.shape, const), pl.BlockSpec(b3.shape, const),
        pl.BlockSpec(w4b.shape, const), pl.BlockSpec(b4p.shape, const),
    ]

    flops = 2 * B_pad * (INPUT_SZ * w1.shape[1]
                         + w1.shape[1] * w2.shape[1]
                         + w2.shape[1] * w3.shape[1]
                         + w3.shape[1] * n_pad)
    bytes_accessed = (xb.size * 2
                      + (w1b.size + w2b.size + w3b.size + w4b.size) * 2
                      + (b1.size + b2.size + b3.size + b4p.size) * 4
                      + B_pad * n_pad * 4)

    out = pl.pallas_call(
        mlp_kernel,
        out_shape=jax.ShapeDtypeStruct((B_pad, n_pad), jnp.float32),
        grid=grid,
        in_specs=[pl.BlockSpec((tb, INPUT_SZ), lambda i: (i, 0))] + weight_specs,
        out_specs=pl.BlockSpec((tb, n_pad), lambda i: (i, 0)),
        compiler_params=pltpu.CompilerParams(
            dimension_semantics=("parallel",),
            vmem_limit_bytes=48 << 20),
        cost_estimate=pl.CostEstimate(
            flops=flops, transcendentals=0, bytes_accessed=bytes_accessed),
    )(xb, w1b, b1, w2b, b2, w3b, b3, w4b, b4p)

    return out[:B, :n_classes]


def init_params(key, input_sz, hidden_dim, n_classes):
    """Deterministic init (uniform, like torch's default Linear init bounds)."""
    dims = [
        (input_sz, hidden_dim * 2),
        (hidden_dim * 2, hidden_dim),
        (hidden_dim, hidden_dim // 2),
        (hidden_dim // 2, n_classes),
    ]
    params = []
    for (fan_in, fan_out) in dims:
        key, kw, kb = jax.random.split(key, 3)
        bound = 1.0 / (fan_in ** 0.5)
        w = jax.random.uniform(kw, (fan_in, fan_out), jnp.float32, -bound, bound)
        b = jax.random.uniform(kb, (1, fan_out), jnp.float32, -bound, bound)
        params += [w, b]
    return tuple(params)


if __name__ == "__main__":
    key = jax.random.PRNGKey(0)
    k_x, k_p = jax.random.split(key)

    # Forward hardcodes view(-1, 32*32*3) => input_sz must be 3072.
    B, input_sz, hidden_dim, n_classes = 2, INPUT_SZ, 32, 10

    x = jax.random.normal(k_x, (B, 3, 32, 32), dtype=jnp.float32)
    params = init_params(k_p, input_sz, hidden_dim, n_classes)

    out = base_model_forward(x, params)
    out = jax.block_until_ready(out)

    # quick sanity check against plain-JAX f32 reference (bf16 kernel -> looser tol)
    xf = x.reshape(-1, input_sz)
    w1, b1, w2, b2, w3, b3, w4, b4 = params
    ref = jnp.maximum(xf @ w1 + b1, 0.0)
    ref = jnp.maximum(ref @ w2 + b2, 0.0)
    ref = jnp.maximum(ref @ w3 + b3, 0.0)
    ref = ref @ w4 + b4
    assert out.shape == (B, n_classes)
    assert jnp.allclose(out, ref, atol=5e-2, rtol=5e-2)

    print("KERNEL_OK")
</pallas_src>

<mosaic_0001>
module attributes {stable_mosaic.version = 11 : i64} {
  func.func @mlp_kernel(%arg0: i32, %arg1: memref<8x3072xbf16, #tpu.memory_space<vmem>>, %arg2: memref<3072x64xbf16, #tpu.memory_space<vmem>>, %arg3: memref<1x64xf32, #tpu.memory_space<vmem>>, %arg4: memref<64x32xbf16, #tpu.memory_space<vmem>>, %arg5: memref<1x32xf32, #tpu.memory_space<vmem>>, %arg6: memref<32x16xbf16, #tpu.memory_space<vmem>>, %arg7: memref<1x16xf32, #tpu.memory_space<vmem>>, %arg8: memref<16x128xbf16, #tpu.memory_space<vmem>>, %arg9: memref<1x128xf32, #tpu.memory_space<vmem>>, %arg10: memref<8x128xf32, #tpu.memory_space<vmem>>) attributes {dimension_semantics = [#tpu.dimension_semantics<parallel>], iteration_bounds = array<i64: 1>, scalar_prefetch = 0 : i64, scratch_operands = 0 : i64, tpu.core_type = #tpu.core_type<tc>, window_params = [{transform_indices = @transform_0, window_bounds = array<i64: 8, 3072>}, {pipeline_mode = #tpu.pipeline_mode<synchronous>, transform_indices = @transform_1, window_bounds = array<i64: 3072, 64>}, {pipeline_mode = #tpu.pipeline_mode<synchronous>, transform_indices = @transform_2, window_bounds = array<i64: 1, 64>}, {pipeline_mode = #tpu.pipeline_mode<synchronous>, transform_indices = @transform_3, window_bounds = array<i64: 64, 32>}, {pipeline_mode = #tpu.pipeline_mode<synchronous>, transform_indices = @transform_4, window_bounds = array<i64: 1, 32>}, {pipeline_mode = #tpu.pipeline_mode<synchronous>, transform_indices = @transform_5, window_bounds = array<i64: 32, 16>}, {pipeline_mode = #tpu.pipeline_mode<synchronous>, transform_indices = @transform_6, window_bounds = array<i64: 1, 16>}, {pipeline_mode = #tpu.pipeline_mode<synchronous>, transform_indices = @transform_7, window_bounds = array<i64: 16, 128>}, {pipeline_mode = #tpu.pipeline_mode<synchronous>, transform_indices = @transform_8, window_bounds = array<i64: 1, 128>}, {transform_indices = @transform_9, window_bounds = array<i64: 8, 128>}]} {
    %c0 = arith.constant 0 : index
    %c0_0 = arith.constant 0 : index
    %0 = vector.load %arg1[%c0, %c0_0] : memref<8x3072xbf16, #tpu.memory_space<vmem>>, vector<8x3072xbf16>
    %c0_1 = arith.constant 0 : index
    %c0_2 = arith.constant 0 : index
    %1 = vector.load %arg2[%c0_1, %c0_2] : memref<3072x64xbf16, #tpu.memory_space<vmem>>, vector<3072x64xbf16>
    %cst = arith.constant dense<0.000000e+00> : vector<8x64xf32>
    %2 = tpu.matmul %0, %1, %cst {dimension_numbers = #tpu.dot_dimension_numbers<[1], [0], [0], [1], [0, 0, 1, 1], [], []>} : vector<8x3072xbf16>, vector<3072x64xbf16>, vector<8x64xf32> -> vector<8x64xf32>
    %c0_3 = arith.constant 0 : index
    %c0_4 = arith.constant 0 : index
    %3 = vector.load %arg3[%c0_3, %c0_4] : memref<1x64xf32, #tpu.memory_space<vmem>>, vector<1x64xf32>
    %4 = vector.broadcast %3 : vector<1x64xf32> to vector<8x64xf32>
    %5 = arith.addf %2, %4 : vector<8x64xf32>
    %cst_5 = arith.constant 0.000000e+00 : f32
    %6 = vector.broadcast %cst_5 : f32 to vector<8x64xf32>
    %7 = arith.maximumf %5, %6 : vector<8x64xf32>
    %8 = arith.truncf %7 : vector<8x64xf32> to vector<8x64xbf16>
    %c0_6 = arith.constant 0 : index
    %c0_7 = arith.constant 0 : index
    %9 = vector.load %arg4[%c0_6, %c0_7] : memref<64x32xbf16, #tpu.memory_space<vmem>>, vector<64x32xbf16>
    %cst_8 = arith.constant dense<0.000000e+00> : vector<8x32xf32>
    %10 = tpu.matmul %8, %9, %cst_8 {dimension_numbers = #tpu.dot_dimension_numbers<[1], [0], [0], [1], [0, 0, 1, 1], [], []>} : vector<8x64xbf16>, vector<64x32xbf16>, vector<8x32xf32> -> vector<8x32xf32>
    %c0_9 = arith.constant 0 : index
    %c0_10 = arith.constant 0 : index
    %11 = vector.load %arg5[%c0_9, %c0_10] : memref<1x32xf32, #tpu.memory_space<vmem>>, vector<1x32xf32>
    %12 = vector.broadcast %11 : vector<1x32xf32> to vector<8x32xf32>
    %13 = arith.addf %10, %12 : vector<8x32xf32>
    %cst_11 = arith.constant 0.000000e+00 : f32
    %14 = vector.broadcast %cst_11 : f32 to vector<8x32xf32>
    %15 = arith.maximumf %13, %14 : vector<8x32xf32>
    %16 = arith.truncf %15 : vector<8x32xf32> to vector<8x32xbf16>
    %c0_12 = arith.constant 0 : index
    %c0_13 = arith.constant 0 : index
    %17 = vector.load %arg6[%c0_12, %c0_13] : memref<32x16xbf16, #tpu.memory_space<vmem>>, vector<32x16xbf16>
    %cst_14 = arith.constant dense<0.000000e+00> : vector<8x16xf32>
    %18 = tpu.matmul %16, %17, %cst_14 {dimension_numbers = #tpu.dot_dimension_numbers<[1], [0], [0], [1], [0, 0, 1, 1], [], []>} : vector<8x32xbf16>, vector<32x16xbf16>, vector<8x16xf32> -> vector<8x16xf32>
    %c0_15 = arith.constant 0 : index
    %c0_16 = arith.constant 0 : index
    %19 = vector.load %arg7[%c0_15, %c0_16] : memref<1x16xf32, #tpu.memory_space<vmem>>, vector<1x16xf32>
    %20 = vector.broadcast %19 : vector<1x16xf32> to vector<8x16xf32>
    %21 = arith.addf %18, %20 : vector<8x16xf32>
    %cst_17 = arith.constant 0.000000e+00 : f32
    %22 = vector.broadcast %cst_17 : f32 to vector<8x16xf32>
    %23 = arith.maximumf %21, %22 : vector<8x16xf32>
    %24 = arith.truncf %23 : vector<8x16xf32> to vector<8x16xbf16>
    %c0_18 = arith.constant 0 : index
    %c0_19 = arith.constant 0 : index
    %25 = vector.load %arg8[%c0_18, %c0_19] : memref<16x128xbf16, #tpu.memory_space<vmem>>, vector<16x128xbf16>
    %cst_20 = arith.constant dense<0.000000e+00> : vector<8x128xf32>
    %26 = tpu.matmul %24, %25, %cst_20 {dimension_numbers = #tpu.dot_dimension_numbers<[1], [0], [0], [1], [0, 0, 1, 1], [], []>} : vector<8x16xbf16>, vector<16x128xbf16>, vector<8x128xf32> -> vector<8x128xf32>
    %c0_21 = arith.constant 0 : index
    %c0_22 = arith.constant 0 : index
    %27 = vector.load %arg9[%c0_21, %c0_22] : memref<1x128xf32, #tpu.memory_space<vmem>>, vector<1x128xf32>
    %28 = vector.broadcast %27 : vector<1x128xf32> to vector<8x128xf32>
    %29 = arith.addf %26, %28 : vector<8x128xf32>
    %c0_23 = arith.constant 0 : index
    %c0_24 = arith.constant 0 : index
    %30 = vector.load %arg10[%c0_23, %c0_24] : memref<8x128xf32, #tpu.memory_space<vmem>>, vector<8x128xf32>
    tpu.vector_store %arg10[%c0_23, %c0_24], %29 {strides = array<i32>} : memref<8x128xf32, #tpu.memory_space<vmem>>, vector<8x128xf32>,
    return
  }
  func.func @transform_0(%arg0: i32) -> (i32, i32) {
    %c0_i32 = arith.constant 0 : i32
    %c0_i32_0 = arith.constant 0 : i32
    return %arg0, %c0_i32 : i32, i32
  }
  func.func @transform_1(%arg0: i32) -> (i32, i32) {
    %c0_i32 = arith.constant 0 : i32
    %c0_i32_0 = arith.constant 0 : i32
    %c0_i32_1 = arith.constant 0 : i32
    return %c0_i32, %c0_i32_0 : i32, i32
  }
  func.func @transform_2(%arg0: i32) -> (i32, i32) {
    %c0_i32 = arith.constant 0 : i32
    %c0_i32_0 = arith.constant 0 : i32
    %c0_i32_1 = arith.constant 0 : i32
    return %c0_i32, %c0_i32_0 : i32, i32
  }
  func.func @transform_3(%arg0: i32) -> (i32, i32) {
    %c0_i32 = arith.constant 0 : i32
    %c0_i32_0 = arith.constant 0 : i32
    %c0_i32_1 = arith.constant 0 : i32
    return %c0_i32, %c0_i32_0 : i32, i32
  }
  func.func @transform_4(%arg0: i32) -> (i32, i32) {
    %c0_i32 = arith.constant 0 : i32
    %c0_i32_0 = arith.constant 0 : i32
    %c0_i32_1 = arith.constant 0 : i32
    return %c0_i32, %c0_i32_0 : i32, i32
  }
  func.func @transform_5(%arg0: i32) -> (i32, i32) {
    %c0_i32 = arith.constant 0 : i32
    %c0_i32_0 = arith.constant 0 : i32
    %c0_i32_1 = arith.constant 0 : i32
    return %c0_i32, %c0_i32_0 : i32, i32
  }
  func.func @transform_6(%arg0: i32) -> (i32, i32) {
    %c0_i32 = arith.constant 0 : i32
    %c0_i32_0 = arith.constant 0 : i32
    %c0_i32_1 = arith.constant 0 : i32
    return %c0_i32, %c0_i32_0 : i32, i32
  }
  func.func @transform_7(%arg0: i32) -> (i32, i32) {
    %c0_i32 = arith.constant 0 : i32
    %c0_i32_0 = arith.constant 0 : i32
    %c0_i32_1 = arith.constant 0 : i32
    return %c0_i32, %c0_i32_0 : i32, i32
  }
  func.func @transform_8(%arg0: i32) -> (i32, i32) {
    %c0_i32 = arith.constant 0 : i32
    %c0_i32_0 = arith.constant 0 : i32
    %c0_i32_1 = arith.constant 0 : i32
    return %c0_i32, %c0_i32_0 : i32, i32
  }
  func.func @transform_9(%arg0: i32) -> (i32, i32) {
    %c0_i32 = arith.constant 0 : i32
    %c0_i32_0 = arith.constant 0 : i32
    return %arg0, %c0_i32 : i32, i32
  }
}

</mosaic_0001>

<llo_original>
// kernel: tpu_custom_call.1
$region0: #{tpu_custom_call.1}
  #allocation0 [shape = 'u32[]', space=smem, size = 0x4, offset = 0x4, fixed_abs, tag = 'smem constant byte address 0x4 - core index']
  #allocation1 [shape = 'u32[144,128]{1,0:T(1,128)}', space=vmem, size = 0x12000, scoped, tag = 'internal scratch']
  %s0 = inlined_call_operand.vmem [shape: bf16[8,3072], index: 0, kind: input, shape index: {}]
  %s1 = inlined_call_operand.vmem [shape: bf16[3072,64], index: 1, kind: input, shape index: {}]
  %s2 = inlined_call_operand.vmem [shape: f32[1,64], index: 2, kind: input, shape index: {}]
  %s3 = inlined_call_operand.vmem [shape: bf16[64,32], index: 3, kind: input, shape index: {}]
  %s4 = inlined_call_operand.vmem [shape: f32[1,32], index: 4, kind: input, shape index: {}]
  %s5 = inlined_call_operand.vmem [shape: bf16[32,16], index: 5, kind: input, shape index: {}]
  %s6 = inlined_call_operand.vmem [shape: f32[1,16], index: 6, kind: input, shape index: {}]
  %s7 = inlined_call_operand.vmem [shape: bf16[16,128], index: 7, kind: input, shape index: {}]
  %s8 = inlined_call_operand.vmem [shape: f32[1,128], index: 8, kind: input, shape index: {}]
  %s9 = inlined_call_operand.hbm [shape: f32[8,128], index: 9, kind: output, shape index: {}]
  %s10 = sld [smem:[#allocation0]]
  $region46: #{tpu_custom_call.1} parent=0
    _
  %s12 = ssub.s32 1, %s10
  %s13 = scalar_select 0, %s12, %s10
  $region1: #{tpu_custom_call.1} parent=0
    #allocation2 [shape = 'u8[4096]{0}', space=vmem, size = 0x1000, scoped, tag = 'output window, operand 0, single buffered']
    #allocation3 [shape = 's32[1]{0}', space=sflag, size = 0x4, scoped, tag = 'scoped memory for tpu_custom_call.1']
    %14 = vsyncpa [#allocation3], 0
    // Predicated region
    $region2: #{tpu_custom_call.1} parent=1 // pred_check
      _
    $region3: #{tpu_custom_call.1} parent=1 // pred_check_branch
      %16 = sbr.rel (0) target = $region5
    $region4: #{tpu_custom_call.1} parent=1 // pred_region
      _
    $region5: #{tpu_custom_call.1} parent=1 // pred_fallthru
      _
    // Predicated region
    $region6: #{tpu_custom_call.1} parent=1 // pred_check
      _
    $region7: #{tpu_custom_call.1} parent=1 // pred_check_branch
      %18 = sbr.rel (0) target = $region9
    $region8: #{tpu_custom_call.1} parent=1 // pred_region
      _
    $region9: #{tpu_custom_call.1} parent=1 // pred_fallthru
      _
    // Predicated region
    $region10: #{tpu_custom_call.1} parent=1 // pred_check
      _
    $region11: #{tpu_custom_call.1} parent=1 // pred_check_branch
      %20 = sbr.rel (0) target = $region13
    $region12: #{tpu_custom_call.1} parent=1 // pred_region
      _
    $region13: #{tpu_custom_call.1} parent=1 // pred_fallthru
      _
    // Predicated region
    $region14: #{tpu_custom_call.1} parent=1 // pred_check
      _
    $region15: #{tpu_custom_call.1} parent=1 // pred_check_branch
      %22 = sbr.rel (0) target = $region17
    $region16: #{tpu_custom_call.1} parent=1 // pred_region
      _
    $region17: #{tpu_custom_call.1} parent=1 // pred_fallthru
      _
    // Predicated region
    $region18: #{tpu_custom_call.1} parent=1 // pred_check
      _
    $region19: #{tpu_custom_call.1} parent=1 // pred_check_branch
      %24 = sbr.rel (0) target = $region21
    $region20: #{tpu_custom_call.1} parent=1 // pred_region
      _
    $region21: #{tpu_custom_call.1} parent=1 // pred_fallthru
      _
    // Predicated region
    $region22: #{tpu_custom_call.1} parent=1 // pred_check
      _
    $region23: #{tpu_custom_call.1} parent=1 // pred_check_branch
      %26 = sbr.rel (0) target = $region25
    $region24: #{tpu_custom_call.1} parent=1 // pred_region
      _
    $region25: #{tpu_custom_call.1} parent=1 // pred_fallthru
      _
    // Predicated region
    $region26: #{tpu_custom_call.1} parent=1 // pred_check
      _
    $region27: #{tpu_custom_call.1} parent=1 // pred_check_branch
      %28 = sbr.rel (0) target = $region29
    $region28: #{tpu_custom_call.1} parent=1 // pred_region
      _
    $region29: #{tpu_custom_call.1} parent=1 // pred_fallthru
      _
    // Predicated region
    $region30: #{tpu_custom_call.1} parent=1 // pred_check
      _
    $region31: #{tpu_custom_call.1} parent=1 // pred_check_branch
      %30 = sbr.rel (0) target = $region33
    $region32: #{tpu_custom_call.1} parent=1 // pred_region
      _
    $region33: #{tpu_custom_call.1} parent=1 // pred_fallthru
      _
    // Predicated region
    $region34: #{tpu_custom_call.1} parent=1 // pred_check
      _
    $region35: #{tpu_custom_call.1} parent=1 // pred_check_branch
      %32 = sbr.rel (0) target = $region37
    $region36: #{tpu_custom_call.1} parent=1 // pred_region
      _
    $region37: #{tpu_custom_call.1} parent=1 // pred_fallthru
      _
    %v34 = vld [vmem:[%s0] sm:$0xff]
    %v35 = vld [vmem:[%s0 + $0x8] sm:$0xff]
    %v36 = vld [vmem:[%s0 + $0x10] sm:$0xff]
    %v37 = vld [vmem:[%s0 + $0x18] sm:$0xff]
    %v38 = vld [vmem:[%s0 + $0x20] sm:$0xff]
    %v39 = vld [vmem:[%s0 + $0x28] sm:$0xff]
    %v40 = vld [vmem:[%s0 + $0x30] sm:$0xff]
    %v41 = vld [vmem:[%s0 + $0x38] sm:$0xff]
    %v42 = vld [vmem:[%s0 + $0x40] sm:$0xff]
    %v43 = vld [vmem:[%s0 + $0x48] sm:$0xff]
    %v44 = vld [vmem:[%s0 + $0x50] sm:$0xff]
    %v45 = vld [vmem:[%s0 + $0x58] sm:$0xff]
    %v46 = vld [vmem:[%s1] sm:$0xf]
    %v47 = vld [vmem:[%s1 + $0x4] sm:$0xf]
    %v48 = vld [vmem:[%s1 + $0x8] sm:$0xf]
    %v49 = vld [vmem:[%s1 + $0xc] sm:$0xf]
    %v50 = vld [vmem:[%s1 + $0x10] sm:$0xf]
    %v51 = vld [vmem:[%s1 + $0x14] sm:$0xf]
    %v52 = vld [vmem:[%s1 + $0x18] sm:$0xf]
    %v53 = vld [vmem:[%s1 + $0x1c] sm:$0xf]
    %v54 = vld [vmem:[%s1 + $0x20] sm:$0xf]
    %v55 = vld [vmem:[%s1 + $0x24] sm:$0xf]
    %v56 = vld [vmem:[%s1 + $0x28] sm:$0xf]
    %v57 = vld [vmem:[%s1 + $0x2c] sm:$0xf]
    %v58 = vld [vmem:[%s1 + $0x30] sm:$0xf]
    %v59 = vld [vmem:[%s1 + $0x34] sm:$0xf]
    %v60 = vld [vmem:[%s1 + $0x38] sm:$0xf]
    %v61 = vld [vmem:[%s1 + $0x3c] sm:$0xf]
    %v62 = vld [vmem:[%s1 + $0x40] sm:$0xf]
    %v63 = vld [vmem:[%s1 + $0x44] sm:$0xf]
    %v64 = vld [vmem:[%s1 + $0x48] sm:$0xf]
    %v65 = vld [vmem:[%s1 + $0x4c] sm:$0xf]
    %v66 = vld [vmem:[%s1 + $0x50] sm:$0xf]
    %v67 = vld [vmem:[%s1 + $0x54] sm:$0xf]
    %v68 = vld [vmem:[%s1 + $0x58] sm:$0xf]
    %v69 = vld [vmem:[%s1 + $0x5c] sm:$0xf]
    %v70 = vld [vmem:[%s1 + $0x60] sm:$0xf]
    %v71 = vld [vmem:[%s1 + $0x64] sm:$0xf]
    %v72 = vld [vmem:[%s1 + $0x68] sm:$0xf]
    %v73 = vld [vmem:[%s1 + $0x6c] sm:$0xf]
    %v74 = vld [vmem:[%s1 + $0x70] sm:$0xf]
    %v75 = vld [vmem:[%s1 + $0x74] sm:$0xf]
    %v76 = vld [vmem:[%s1 + $0x78] sm:$0xf]
    %v77 = vld [vmem:[%s1 + $0x7c] sm:$0xf]
    %v78 = vld [vmem:[%s1 + $0x80] sm:$0xf]
    %v79 = vld [vmem:[%s1 + $0x84] sm:$0xf]
    %v80 = vld [vmem:[%s1 + $0x88] sm:$0xf]
    %v81 = vld [vmem:[%s1 + $0x8c] sm:$0xf]
    %v82 = vld [vmem:[%s1 + $0x90] sm:$0xf]
    %v83 = vld [vmem:[%s1 + $0x94] sm:$0xf]
    %v84 = vld [vmem:[%s1 + $0x98] sm:$0xf]
    %v85 = vld [vmem:[%s1 + $0x9c] sm:$0xf]
    %v86 = vld [vmem:[%s1 + $0xa0] sm:$0xf]
    %v87 = vld [vmem:[%s1 + $0xa4] sm:$0xf]
    %v88 = vld [vmem:[%s1 + $0xa8] sm:$0xf]
    %v89 = vld [vmem:[%s1 + $0xac] sm:$0xf]
    %v90 = vld [vmem:[%s1 + $0xb0] sm:$0xf]
    %v91 = vld [vmem:[%s1 + $0xb4] sm:$0xf]
    %v92 = vld [vmem:[%s1 + $0xb8] sm:$0xf]
    %v93 = vld [vmem:[%s1 + $0xbc] sm:$0xf]
    %v94 = vld [vmem:[%s1 + $0xc0] sm:$0xf]
    %v95 = vld [vmem:[%s1 + $0xc4] sm:$0xf]
    %v96 = vld [vmem:[%s1 + $0xc8] sm:$0xf]
    %v97 = vld [vmem:[%s1 + $0xcc] sm:$0xf]
    %v98 = vld [vmem:[%s1 + $0xd0] sm:$0xf]
    %v99 = vld [vmem:[%s1 + $0xd4] sm:$0xf]
    %v100 = vld [vmem:[%s1 + $0xd8] sm:$0xf]
    %v101 = vld [vmem:[%s1 + $0xdc] sm:$0xf]
    %v102 = vld [vmem:[%s1 + $0xe0] sm:$0xf]
    %v103 = vld [vmem:[%s1 + $0xe4] sm:$0xf]
    %v104 = vld [vmem:[%s1 + $0xe8] sm:$0xf]
    %v105 = vld [vmem:[%s1 + $0xec] sm:$0xf]
    %v106 = vld [vmem:[%s1 + $0xf0] sm:$0xf]
    %v107 = vld [vmem:[%s1 + $0xf4] sm:$0xf]
    %v108 = vld [vmem:[%s1 + $0xf8] sm:$0xf]
    %v109 = vld [vmem:[%s1 + $0xfc] sm:$0xf]
    %v110 = vld [vmem:[%s1 + $0x100] sm:$0xf]
    %v111 = vld [vmem:[%s1 + $0x104] sm:$0xf]
    %v112 = vld [vmem:[%s1 + $0x108] sm:$0xf]
    %v113 = vld [vmem:[%s1 + $0x10c] sm:$0xf]
    %v114 = vld [vmem:[%s1 + $0x110] sm:$0xf]
    %v115 = vld [vmem:[%s1 + $0x114] sm:$0xf]
    %v116 = vld [vmem:[%s1 + $0x118] sm:$0xf]
    %v117 = vld [vmem:[%s1 + $0x11c] sm:$0xf]
    %v118 = vld [vmem:[%s1 + $0x120] sm:$0xf]
    %v119 = vld [vmem:[%s1 + $0x124] sm:$0xf]
    %v120 = vld [vmem:[%s1 + $0x128] sm:$0xf]
    %v121 = vld [vmem:[%s1 + $0x12c] sm:$0xf]
    %v122 = vld [vmem:[%s1 + $0x130] sm:$0xf]
    %v123 = vld [vmem:[%s1 + $0x134] sm:$0xf]
    %v124 = vld [vmem:[%s1 + $0x138] sm:$0xf]
    %v125 = vld [vmem:[%s1 + $0x13c] sm:$0xf]
    %v126 = vld [vmem:[%s1 + $0x140] sm:$0xf]
    %v127 = vld [vmem:[%s1 + $0x144] sm:$0xf]
    %v128 = vld [vmem:[%s1 + $0x148] sm:$0xf]
    %v129 = vld [vmem:[%s1 + $0x14c] sm:$0xf]
    %v130 = vld [vmem:[%s1 + $0x150] sm:$0xf]
    %v131 = vld [vmem:[%s1 + $0x154] sm:$0xf]
    %v132 = vld [vmem:[%s1 + $0x158] sm:$0xf]
    %v133 = vld [vmem:[%s1 + $0x15c] sm:$0xf]
    %v134 = vld [vmem:[%s1 + $0x160] sm:$0xf]
    %v135 = vld [vmem:[%s1 + $0x164] sm:$0xf]
    %v136 = vld [vmem:[%s1 + $0x168] sm:$0xf]
    %v137 = vld [vmem:[%s1 + $0x16c] sm:$0xf]
    %v138 = vld [vmem:[%s1 + $0x170] sm:$0xf]
    %v139 = vld [vmem:[%s1 + $0x174] sm:$0xf]
    %v140 = vld [vmem:[%s1 + $0x178] sm:$0xf]
    %v141 = vld [vmem:[%s1 + $0x17c] sm:$0xf]
    %v142 = vld [vmem:[%s1 + $0x180] sm:$0xf]
    %v143 = vld [vmem:[%s1 + $0x184] sm:$0xf]
    %v144 = vld [vmem:[%s1 + $0x188] sm:$0xf]
    %v145 = vld [vmem:[%s1 + $0x18c] sm:$0xf]
    %v146 = vld [vmem:[%s1 + $0x190] sm:$0xf]
    %v147 = vld [vmem:[%s1 + $0x194] sm:$0xf]
    %v148 = vld [vmem:[%s1 + $0x198] sm:$0xf]
    %v149 = vld [vmem:[%s1 + $0x19c] sm:$0xf]
    %v150 = vld [vmem:[%s1 + $0x1a0] sm:$0xf]
    %v151 = vld [vmem:[%s1 + $0x1a4] sm:$0xf]
    %v152 = vld [vmem:[%s1 + $0x1a8] sm:$0xf]
    %v153 = vld [vmem:[%s1 + $0x1ac] sm:$0xf]
    %v154 = vld [vmem:[%s1 + $0x1b0] sm:$0xf]
    %v155 = vld [vmem:[%s1 + $0x1b4] sm:$0xf]
    %v156 = vld [vmem:[%s1 + $0x1b8] sm:$0xf]
    %v157 = vld [vmem:[%s1 + $0x1bc] sm:$0xf]
    %v158 = vld [vmem:[%s1 + $0x1c0] sm:$0xf]
    %v159 = vld [vmem:[%s1 + $0x1c4] sm:$0xf]
    %v160 = vld [vmem:[%s1 + $0x1c8] sm:$0xf]
    %v161 = vld [vmem:[%s1 + $0x1cc] sm:$0xf]
    %v162 = vld [vmem:[%s1 + $0x1d0] sm:$0xf]
    %v163 = vld [vmem:[%s1 + $0x1d4] sm:$0xf]
    %v164 = vld [vmem:[%s1 + $0x1d8] sm:$0xf]
    %v165 = vld [vmem:[%s1 + $0x1dc] sm:$0xf]
    %v166 = vld [vmem:[%s1 + $0x1e0] sm:$0xf]
    %v167 = vld [vmem:[%s1 + $0x1e4] sm:$0xf]
    %v168 = vld [vmem:[%s1 + $0x1e8] sm:$0xf]
    %v169 = vld [vmem:[%s1 + $0x1ec] sm:$0xf]
    %v170 = vld [vmem:[%s1 + $0x1f0] sm:$0xf]
    %v171 = vld [vmem:[%s1 + $0x1f4] sm:$0xf]
    %v172 = vld [vmem:[%s1 + $0x1f8] sm:$0xf]
    %v173 = vld [vmem:[%s1 + $0x1fc] sm:$0xf]
    %v174 = vld [vmem:[%s1 + $0x200] sm:$0xf]
    %v175 = vld [vmem:[%s1 + $0x204] sm:$0xf]
    %v176 = vld [vmem:[%s1 + $0x208] sm:$0xf]
    %v177 = vld [vmem:[%s1 + $0x20c] sm:$0xf]
    %v178 = vld [vmem:[%s1 + $0x210] sm:$0xf]
    %v179 = vld [vmem:[%s1 + $0x214] sm:$0xf]
    %v180 = vld [vmem:[%s1 + $0x218] sm:$0xf]
    %v181 = vld [vmem:[%s1 + $0x21c] sm:$0xf]
    %v182 = vld [vmem:[%s1 + $0x220] sm:$0xf]
    %v183 = vld [vmem:[%s1 + $0x224] sm:$0xf]
    %v184 = vld [vmem:[%s1 + $0x228] sm:$0xf]
    %v185 = vld [vmem:[%s1 + $0x22c] sm:$0xf]
    %v186 = vld [vmem:[%s1 + $0x230] sm:$0xf]
    %v187 = vld [vmem:[%s1 + $0x234] sm:$0xf]
    %v188 = vld [vmem:[%s1 + $0x238] sm:$0xf]
    %v189 = vld [vmem:[%s1 + $0x23c] sm:$0xf]
    %v190 = vld [vmem:[%s1 + $0x240] sm:$0xf]
    %v191 = vld [vmem:[%s1 + $0x244] sm:$0xf]
    %v192 = vld [vmem:[%s1 + $0x248] sm:$0xf]
    %v193 = vld [vmem:[%s1 + $0x24c] sm:$0xf]
    %v194 = vld [vmem:[%s1 + $0x250] sm:$0xf]
    %v195 = vld [vmem:[%s1 + $0x254] sm:$0xf]
    %v196 = vld [vmem:[%s1 + $0x258] sm:$0xf]
    %v197 = vld [vmem:[%s1 + $0x25c] sm:$0xf]
    %v198 = vld [vmem:[%s1 + $0x260] sm:$0xf]
    %v199 = vld [vmem:[%s1 + $0x264] sm:$0xf]
    %v200 = vld [vmem:[%s1 + $0x268] sm:$0xf]
    %v201 = vld [vmem:[%s1 + $0x26c] sm:$0xf]
    %v202 = vld [vmem:[%s1 + $0x270] sm:$0xf]
    %v203 = vld [vmem:[%s1 + $0x274] sm:$0xf]
    %v204 = vld [vmem:[%s1 + $0x278] sm:$0xf]
    %v205 = vld [vmem:[%s1 + $0x27c] sm:$0xf]
    %v206 = vld [vmem:[%s1 + $0x280] sm:$0xf]
    %v207 = vld [vmem:[%s1 + $0x284] sm:$0xf]
    %v208 = vld [vmem:[%s1 + $0x288] sm:$0xf]
    %v209 = vld [vmem:[%s1 + $0x28c] sm:$0xf]
    %v210 = vld [vmem:[%s1 + $0x290] sm:$0xf]
    %v211 = vld [vmem:[%s1 + $0x294] sm:$0xf]
    %v212 = vld [vmem:[%s1 + $0x298] sm:$0xf]
    %v213 = vld [vmem:[%s1 + $0x29c] sm:$0xf]
    %v214 = vld [vmem:[%s1 + $0x2a0] sm:$0xf]
    %v215 = vld [vmem:[%s1 + $0x2a4] sm:$0xf]
    %v216 = vld [vmem:[%s1 + $0x2a8] sm:$0xf]
    %v217 = vld [vmem:[%s1 + $0x2ac] sm:$0xf]
    %v218 = vld [vmem:[%s1 + $0x2b0] sm:$0xf]
    %v219 = vld [vmem:[%s1 + $0x2b4] sm:$0xf]
    %v220 = vld [vmem:[%s1 + $0x2b8] sm:$0xf]
    %v221 = vld [vmem:[%s1 + $0x2bc] sm:$0xf]
    %v222 = vld [vmem:[%s1 + $0x2c0] sm:$0xf]
    %v223 = vld [vmem:[%s1 + $0x2c4] sm:$0xf]
    %v224 = vld [vmem:[%s1 + $0x2c8] sm:$0xf]
    %v225 = vld [vmem:[%s1 + $0x2cc] sm:$0xf]
    %v226 = vld [vmem:[%s1 + $0x2d0] sm:$0xf]
    %v227 = vld [vmem:[%s1 + $0x2d4] sm:$0xf]
    %v228 = vld [vmem:[%s1 + $0x2d8] sm:$0xf]
    %v229 = vld [vmem:[%s1 + $0x2dc] sm:$0xf]
    %v230 = vld [vmem:[%s1 + $0x2e0] sm:$0xf]
    %v231 = vld [vmem:[%s1 + $0x2e4] sm:$0xf]
    %v232 = vld [vmem:[%s1 + $0x2e8] sm:$0xf]
    %v233 = vld [vmem:[%s1 + $0x2ec] sm:$0xf]
    %v234 = vld [vmem:[%s1 + $0x2f0] sm:$0xf]
    %v235 = vld [vmem:[%s1 + $0x2f4] sm:$0xf]
    %v236 = vld [vmem:[%s1 + $0x2f8] sm:$0xf]
    %v237 = vld [vmem:[%s1 + $0x2fc] sm:$0xf]
    %v238 = vld [vmem:[%s1 + $0x300] sm:$0xf]
    %v239 = vld [vmem:[%s1 + $0x304] sm:$0xf]
    %v240 = vld [vmem:[%s1 + $0x308] sm:$0xf]
    %v241 = vld [vmem:[%s1 + $0x30c] sm:$0xf]
    %v242 = vld [vmem:[%s1 + $0x310] sm:$0xf]
    %v243 = vld [vmem:[%s1 + $0x314] sm:$0xf]
    %v244 = vld [vmem:[%s1 + $0x318] sm:$0xf]
    %v245 = vld [vmem:[%s1 + $0x31c] sm:$0xf]
    %v246 = vld [vmem:[%s1 + $0x320] sm:$0xf]
    %v247 = vld [vmem:[%s1 + $0x324] sm:$0xf]
    %v248 = vld [vmem:[%s1 + $0x328] sm:$0xf]
    %v249 = vld [vmem:[%s1 + $0x32c] sm:$0xf]
    %v250 = vld [vmem:[%s1 + $0x330] sm:$0xf]
    %v251 = vld [vmem:[%s1 + $0x334] sm:$0xf]
    %v252 = vld [vmem:[%s1 + $0x338] sm:$0xf]
    %v253 = vld [vmem:[%s1 + $0x33c] sm:$0xf]
    %v254 = vld [vmem:[%s1 + $0x340] sm:$0xf]
    %v255 = vld [vmem:[%s1 + $0x344] sm:$0xf]
    %v256 = vld [vmem:[%s1 + $0x348] sm:$0xf]
    %v257 = vld [vmem:[%s1 + $0x34c] sm:$0xf]
    %v258 = vld [vmem:[%s1 + $0x350] sm:$0xf]
    %v259 = vld [vmem:[%s1 + $0x354] sm:$0xf]
    %v260 = vld [vmem:[%s1 + $0x358] sm:$0xf]
    %v261 = vld [vmem:[%s1 + $0x35c] sm:$0xf]
    %v262 = vld [vmem:[%s1 + $0x360] sm:$0xf]
    %v263 = vld [vmem:[%s1 + $0x364] sm:$0xf]
    %v264 = vld [vmem:[%s1 + $0x368] sm:$0xf]
    %v265 = vld [vmem:[%s1 + $0x36c] sm:$0xf]
    %v266 = vld [vmem:[%s1 + $0x370] sm:$0xf]
    %v267 = vld [vmem:[%s1 + $0x374] sm:$0xf]
    %v268 = vld [vmem:[%s1 + $0x378] sm:$0xf]
    %v269 = vld [vmem:[%s1 + $0x37c] sm:$0xf]
    %v270 = vld [vmem:[%s1 + $0x380] sm:$0xf]
    %v271 = vld [vmem:[%s1 + $0x384] sm:$0xf]
    %v272 = vld [vmem:[%s1 + $0x388] sm:$0xf]
    %v273 = vld [vmem:[%s1 + $0x38c] sm:$0xf]
    %v274 = vld [vmem:[%s1 + $0x390] sm:$0xf]
    %v275 = vld [vmem:[%s1 + $0x394] sm:$0xf]
    %v276 = vld [vmem:[%s1 + $0x398] sm:$0xf]
    %v277 = vld [vmem:[%s1 + $0x39c] sm:$0xf]
    %v278 = vld [vmem:[%s1 + $0x3a0] sm:$0xf]
    %v279 = vld [vmem:[%s1 + $0x3a4] sm:$0xf]
    %v280 = vld [vmem:[%s1 + $0x3a8] sm:$0xf]
    %v281 = vld [vmem:[%s1 + $0x3ac] sm:$0xf]
    %v282 = vld [vmem:[%s1 + $0x3b0] sm:$0xf]
    %v283 = vld [vmem:[%s1 + $0x3b4] sm:$0xf]
    %v284 = vld [vmem:[%s1 + $0x3b8] sm:$0xf]
    %v285 = vld [vmem:[%s1 + $0x3bc] sm:$0xf]
    %v286 = vld [vmem:[%s1 + $0x3c0] sm:$0xf]
    %v287 = vld [vmem:[%s1 + $0x3c4] sm:$0xf]
    %v288 = vld [vmem:[%s1 + $0x3c8] sm:$0xf]
    %v289 = vld [vmem:[%s1 + $0x3cc] sm:$0xf]
    %v290 = vld [vmem:[%s1 + $0x3d0] sm:$0xf]
    %v291 = vld [vmem:[%s1 + $0x3d4] sm:$0xf]
    %v292 = vld [vmem:[%s1 + $0x3d8] sm:$0xf]
    %v293 = vld [vmem:[%s1 + $0x3dc] sm:$0xf]
    %v294 = vld [vmem:[%s1 + $0x3e0] sm:$0xf]
    %v295 = vld [vmem:[%s1 + $0x3e4] sm:$0xf]
    %v296 = vld [vmem:[%s1 + $0x3e8] sm:$0xf]
    %v297 = vld [vmem:[%s1 + $0x3ec] sm:$0xf]
    %v298 = vld [vmem:[%s1 + $0x3f0] sm:$0xf]
    %v299 = vld [vmem:[%s1 + $0x3f4] sm:$0xf]
    %v300 = vld [vmem:[%s1 + $0x3f8] sm:$0xf]
    %v301 = vld [vmem:[%s1 + $0x3fc] sm:$0xf]
    %v302 = vld [vmem:[%s1 + $0x400] sm:$0xf]
    %v303 = vld [vmem:[%s1 + $0x404] sm:$0xf]
    %v304 = vld [vmem:[%s1 + $0x408] sm:$0xf]
    %v305 = vld [vmem:[%s1 + $0x40c] sm:$0xf]
    %v306 = vld [vmem:[%s1 + $0x410] sm:$0xf]
    %v307 = vld [vmem:[%s1 + $0x414] sm:$0xf]
    %v308 = vld [vmem:[%s1 + $0x418] sm:$0xf]
    %v309 = vld [vmem:[%s1 + $0x41c] sm:$0xf]
    %v310 = vld [vmem:[%s1 + $0x420] sm:$0xf]
    %v311 = vld [vmem:[%s1 + $0x424] sm:$0xf]
    %v312 = vld [vmem:[%s1 + $0x428] sm:$0xf]
    %v313 = vld [vmem:[%s1 + $0x42c] sm:$0xf]
    %v314 = vld [vmem:[%s1 + $0x430] sm:$0xf]
    %v315 = vld [vmem:[%s1 + $0x434] sm:$0xf]
    %v316 = vld [vmem:[%s1 + $0x438] sm:$0xf]
    %v317 = vld [vmem:[%s1 + $0x43c] sm:$0xf]
    %v318 = vld [vmem:[%s1 + $0x440] sm:$0xf]
    %v319 = vld [vmem:[%s1 + $0x444] sm:$0xf]
    %v320 = vld [vmem:[%s1 + $0x448] sm:$0xf]
    %v321 = vld [vmem:[%s1 + $0x44c] sm:$0xf]
    %v322 = vld [vmem:[%s1 + $0x450] sm:$0xf]
    %v323 = vld [vmem:[%s1 + $0x454] sm:$0xf]
    %v324 = vld [vmem:[%s1 + $0x458] sm:$0xf]
    %v325 = vld [vmem:[%s1 + $0x45c] sm:$0xf]
    %v326 = vld [vmem:[%s1 + $0x460] sm:$0xf]
    %v327 = vld [vmem:[%s1 + $0x464] sm:$0xf]
    %v328 = vld [vmem:[%s1 + $0x468] sm:$0xf]
    %v329 = vld [vmem:[%s1 + $0x46c] sm:$0xf]
    %v330 = vld [vmem:[%s1 + $0x470] sm:$0xf]
    %v331 = vld [vmem:[%s1 + $0x474] sm:$0xf]
    %v332 = vld [vmem:[%s1 + $0x478] sm:$0xf]
    %v333 = vld [vmem:[%s1 + $0x47c] sm:$0xf]
    %v334 = vld [vmem:[%s1 + $0x480] sm:$0xf]
    %v335 = vld [vmem:[%s1 + $0x484] sm:$0xf]
    %v336 = vld [vmem:[%s1 + $0x488] sm:$0xf]
    %v337 = vld [vmem:[%s1 + $0x48c] sm:$0xf]
    %v338 = vld [vmem:[%s1 + $0x490] sm:$0xf]
    %v339 = vld [vmem:[%s1 + $0x494] sm:$0xf]
    %v340 = vld [vmem:[%s1 + $0x498] sm:$0xf]
    %v341 = vld [vmem:[%s1 + $0x49c] sm:$0xf]
    %v342 = vld [vmem:[%s1 + $0x4a0] sm:$0xf]
    %v343 = vld [vmem:[%s1 + $0x4a4] sm:$0xf]
    %v344 = vld [vmem:[%s1 + $0x4a8] sm:$0xf]
    %v345 = vld [vmem:[%s1 + $0x4ac] sm:$0xf]
    %v346 = vld [vmem:[%s1 + $0x4b0] sm:$0xf]
    %v347 = vld [vmem:[%s1 + $0x4b4] sm:$0xf]
    %v348 = vld [vmem:[%s1 + $0x4b8] sm:$0xf]
    %v349 = vld [vmem:[%s1 + $0x4bc] sm:$0xf]
    %v350 = vld [vmem:[%s1 + $0x4c0] sm:$0xf]
    %v351 = vld [vmem:[%s1 + $0x4c4] sm:$0xf]
    %v352 = vld [vmem:[%s1 + $0x4c8] sm:$0xf]
    %v353 = vld [vmem:[%s1 + $0x4cc] sm:$0xf]
    %v354 = vld [vmem:[%s1 + $0x4d0] sm:$0xf]
    %v355 = vld [vmem:[%s1 + $0x4d4] sm:$0xf]
    %v356 = vld [vmem:[%s1 + $0x4d8] sm:$0xf]
    %v357 = vld [vmem:[%s1 + $0x4dc] sm:$0xf]
    %v358 = vld [vmem:[%s1 + $0x4e0] sm:$0xf]
    %v359 = vld [vmem:[%s1 + $0x4e4] sm:$0xf]
    %v360 = vld [vmem:[%s1 + $0x4e8] sm:$0xf]
    %v361 = vld [vmem:[%s1 + $0x4ec] sm:$0xf]
    %v362 = vld [vmem:[%s1 + $0x4f0] sm:$0xf]
    %v363 = vld [vmem:[%s1 + $0x4f4] sm:$0xf]
    %v364 = vld [vmem:[%s1 + $0x4f8] sm:$0xf]
    %v365 = vld [vmem:[%s1 + $0x4fc] sm:$0xf]
    %v366 = vld [vmem:[%s1 + $0x500] sm:$0xf]
    %v367 = vld [vmem:[%s1 + $0x504] sm:$0xf]
    %v368 = vld [vmem:[%s1 + $0x508] sm:$0xf]
    %v369 = vld [vmem:[%s1 + $0x50c] sm:$0xf]
    %v370 = vld [vmem:[%s1 + $0x510] sm:$0xf]
    %v371 = vld [vmem:[%s1 + $0x514] sm:$0xf]
    %v372 = vld [vmem:[%s1 + $0x518] sm:$0xf]
    %v373 = vld [vmem:[%s1 + $0x51c] sm:$0xf]
    %v374 = vld [vmem:[%s1 + $0x520] sm:$0xf]
    %v375 = vld [vmem:[%s1 + $0x524] sm:$0xf]
    %v376 = vld [vmem:[%s1 + $0x528] sm:$0xf]
    %v377 = vld [vmem:[%s1 + $0x52c] sm:$0xf]
    %v378 = vld [vmem:[%s1 + $0x530] sm:$0xf]
    %v379 = vld [vmem:[%s1 + $0x534] sm:$0xf]
    %v380 = vld [vmem:[%s1 + $0x538] sm:$0xf]
    %v381 = vld [vmem:[%s1 + $0x53c] sm:$0xf]
    %v382 = vld [vmem:[%s1 + $0x540] sm:$0xf]
    %v383 = vld [vmem:[%s1 + $0x544] sm:$0xf]
    %v384 = vld [vmem:[%s1 + $0x548] sm:$0xf]
    %v385 = vld [vmem:[%s1 + $0x54c] sm:$0xf]
    %v386 = vld [vmem:[%s1 + $0x550] sm:$0xf]
    %v387 = vld [vmem:[%s1 + $0x554] sm:$0xf]
    %v388 = vld [vmem:[%s1 + $0x558] sm:$0xf]
    %v389 = vld [vmem:[%s1 + $0x55c] sm:$0xf]
    %v390 = vld [vmem:[%s1 + $0x560] sm:$0xf]
    %v391 = vld [vmem:[%s1 + $0x564] sm:$0xf]
    %v392 = vld [vmem:[%s1 + $0x568] sm:$0xf]
    %v393 = vld [vmem:[%s1 + $0x56c] sm:$0xf]
    %v394 = vld [vmem:[%s1 + $0x570] sm:$0xf]
    %v395 = vld [vmem:[%s1 + $0x574] sm:$0xf]
    %v396 = vld [vmem:[%s1 + $0x578] sm:$0xf]
    %v397 = vld [vmem:[%s1 + $0x57c] sm:$0xf]
    %v398 = vld [vmem:[%s1 + $0x580] sm:$0xf]
    %v399 = vld [vmem:[%s1 + $0x584] sm:$0xf]
    %v400 = vld [vmem:[%s1 + $0x588] sm:$0xf]
    %v401 = vld [vmem:[%s1 + $0x58c] sm:$0xf]
    %v402 = vld [vmem:[%s1 + $0x590] sm:$0xf]
    %v403 = vld [vmem:[%s1 + $0x594] sm:$0xf]
    %v404 = vld [vmem:[%s1 + $0x598] sm:$0xf]
    %v405 = vld [vmem:[%s1 + $0x59c] sm:$0xf]
    %v406 = vld [vmem:[%s1 + $0x5a0] sm:$0xf]
    %v407 = vld [vmem:[%s1 + $0x5a4] sm:$0xf]
    %v408 = vld [vmem:[%s1 + $0x5a8] sm:$0xf]
    %v409 = vld [vmem:[%s1 + $0x5ac] sm:$0xf]
    %v410 = vld [vmem:[%s1 + $0x5b0] sm:$0xf]
    %v411 = vld [vmem:[%s1 + $0x5b4] sm:$0xf]
    %v412 = vld [vmem:[%s1 + $0x5b8] sm:$0xf]
    %v413 = vld [vmem:[%s1 + $0x5bc] sm:$0xf]
    %v414 = vld [vmem:[%s1 + $0x5c0] sm:$0xf]
    %v415 = vld [vmem:[%s1 + $0x5c4] sm:$0xf]
    %v416 = vld [vmem:[%s1 + $0x5c8] sm:$0xf]
    %v417 = vld [vmem:[%s1 + $0x5cc] sm:$0xf]
    %v418 = vld [vmem:[%s1 + $0x5d0] sm:$0xf]
    %v419 = vld [vmem:[%s1 + $0x5d4] sm:$0xf]
    %v420 = vld [vmem:[%s1 + $0x5d8] sm:$0xf]
    %v421 = vld [vmem:[%s1 + $0x5dc] sm:$0xf]
    %v422 = vld [vmem:[%s1 + $0x5e0] sm:$0xf]
    %v423 = vld [vmem:[%s1 + $0x5e4] sm:$0xf]
    %v424 = vld [vmem:[%s1 + $0x5e8] sm:$0xf]
    %v425 = vld [vmem:[%s1 + $0x5ec] sm:$0xf]
    %v426 = vld [vmem:[%s1 + $0x5f0] sm:$0xf]
    %v427 = vld [vmem:[%s1 + $0x5f4] sm:$0xf]
    %v428 = vld [vmem:[%s1 + $0x5f8] sm:$0xf]
    %v429 = vld [vmem:[%s1 + $0x5fc] sm:$0xf]
    %v430 = vld [vmem:[%s2] sm:$0x1]
    %v432 = vlaneseq
    %v433 = vshrl.u32 %v432, 7
    %v434 = vsub.s32 0, %v433
    %v435 = vrot.slane %v430, %v434
    %v449 = vunpack.c.l.b16 %v34
    %v450 = vunpack.c.h.b16 %v34
    %v451 = vunpack.c.l.b16 %v35
    %v452 = vunpack.c.h.b16 %v35
    %v453 = vunpack.c.l.b16 %v36
    %v454 = vunpack.c.h.b16 %v36
    %v455 = vunpack.c.l.b16 %v37
    %v456 = vunpack.c.h.b16 %v37
    %v457 = vunpack.c.l.b16 %v38
    %v458 = vunpack.c.h.b16 %v38
    %v459 = vunpack.c.l.b16 %v39
    %v460 = vunpack.c.h.b16 %v39
    %v461 = vunpack.c.l.b16 %v40
    %v462 = vunpack.c.h.b16 %v40
    %v463 = vunpack.c.l.b16 %v41
    %v464 = vunpack.c.h.b16 %v41
    %v465 = vunpack.c.l.b16 %v42
    %v466 = vunpack.c.h.b16 %v42
    %v467 = vunpack.c.l.b16 %v43
    %v468 = vunpack.c.h.b16 %v43
    %v469 = vunpack.c.l.b16 %v44
    %v470 = vunpack.c.h.b16 %v44
    %v471 = vunpack.c.l.b16 %v45
    %v472 = vunpack.c.h.b16 %v45
    %v473 = vpack.c.b16 %v449, %v449
    %v474 = vpack.c.b16 %v450, %v450
    %v475 = vpack.c.b16 %v451, %v451
    %v476 = vpack.c.b16 %v452, %v452
    %v477 = vpack.c.b16 %v453, %v453
    %v478 = vpack.c.b16 %v454, %v454
    %v479 = vpack.c.b16 %v455, %v455
    %v480 = vpack.c.b16 %v456, %v456
    %v481 = vpack.c.b16 %v457, %v457
    %v482 = vpack.c.b16 %v458, %v458
    %v483 = vpack.c.b16 %v459, %v459
    %v484 = vpack.c.b16 %v460, %v460
    %v485 = vpack.c.b16 %v461, %v461
    %v486 = vpack.c.b16 %v462, %v462
    %v487 = vpack.c.b16 %v463, %v463
    %v488 = vpack.c.b16 %v464, %v464
    %v489 = vpack.c.b16 %v465, %v465
    %v490 = vpack.c.b16 %v466, %v466
    %v491 = vpack.c.b16 %v467, %v467
    %v492 = vpack.c.b16 %v468, %v468
    %v493 = vpack.c.b16 %v469, %v469
    %v494 = vpack.c.b16 %v470, %v470
    %v495 = vpack.c.b16 %v471, %v471
    %v496 = vpack.c.b16 %v472, %v472
    %v905 = vunpack.c.l.b16 %v46
    %v906 = vunpack.c.l.b16 %v47
    %v907 = vunpack.c.l.b16 %v48
    %v908 = vunpack.c.l.b16 %v49
    %v909 = vunpack.c.l.b16 %v50
    %v910 = vunpack.c.l.b16 %v51
    %v911 = vunpack.c.l.b16 %v52
    %v912 = vunpack.c.l.b16 %v53
    %v913 = vunpack.c.l.b16 %v54
    %v914 = vunpack.c.l.b16 %v55
    %v915 = vunpack.c.l.b16 %v56
    %v916 = vunpack.c.l.b16 %v57
    %v917 = vunpack.c.l.b16 %v58
    %v918 = vunpack.c.l.b16 %v59
    %v919 = vunpack.c.l.b16 %v60
    %v920 = vunpack.c.l.b16 %v61
    %v921 = vunpack.c.l.b16 %v62
    %v922 = vunpack.c.l.b16 %v63
    %v923 = vunpack.c.l.b16 %v64
    %v924 = vunpack.c.l.b16 %v65
    %v925 = vunpack.c.l.b16 %v66
    %v926 = vunpack.c.l.b16 %v67
    %v927 = vunpack.c.l.b16 %v68
    %v928 = vunpack.c.l.b16 %v69
    %v929 = vunpack.c.l.b16 %v70
    %v930 = vunpack.c.l.b16 %v71
    %v931 = vunpack.c.l.b16 %v72
    %v932 = vunpack.c.l.b16 %v73
    %v933 = vunpack.c.l.b16 %v74
    %v934 = vunpack.c.l.b16 %v75
    %v935 = vunpack.c.l.b16 %v76
    %v936 = vunpack.c.l.b16 %v77
    %v937 = vunpack.c.l.b16 %v78
    %v938 = vunpack.c.l.b16 %v79
    %v939 = vunpack.c.l.b16 %v80
    %v940 = vunpack.c.l.b16 %v81
    %v941 = vunpack.c.l.b16 %v82
    %v942 = vunpack.c.l.b16 %v83
    %v943 = vunpack.c.l.b16 %v84
    %v944 = vunpack.c.l.b16 %v85
    %v945 = vunpack.c.l.b16 %v86
    %v946 = vunpack.c.l.b16 %v87
    %v947 = vunpack.c.l.b16 %v88
    %v948 = vunpack.c.l.b16 %v89
    %v949 = vunpack.c.l.b16 %v90
    %v950 = vunpack.c.l.b16 %v91
    %v951 = vunpack.c.l.b16 %v92
    %v952 = vunpack.c.l.b16 %v93
    %v953 = vunpack.c.l.b16 %v94
    %v954 = vunpack.c.l.b16 %v95
    %v955 = vunpack.c.l.b16 %v96
    %v956 = vunpack.c.l.b16 %v97
    %v957 = vunpack.c.l.b16 %v98
    %v958 = vunpack.c.l.b16 %v99
    %v959 = vunpack.c.l.b16 %v100
    %v960 = vunpack.c.l.b16 %v101
    %v961 = vunpack.c.l.b16 %v102
    %v962 = vunpack.c.l.b16 %v103
    %v963 = vunpack.c.l.b16 %v104
    %v964 = vunpack.c.l.b16 %v105
    %v965 = vunpack.c.l.b16 %v106
    %v966 = vunpack.c.l.b16 %v107
    %v967 = vunpack.c.l.b16 %v108
    %v968 = vunpack.c.l.b16 %v109
    %v969 = vunpack.c.l.b16 %v110
    %v970 = vunpack.c.l.b16 %v111
    %v971 = vunpack.c.l.b16 %v112
    %v972 = vunpack.c.l.b16 %v113
    %v973 = vunpack.c.l.b16 %v114
    %v974 = vunpack.c.l.b16 %v115
    %v975 = vunpack.c.l.b16 %v116
    %v976 = vunpack.c.l.b16 %v117
    %v977 = vunpack.c.l.b16 %v118
    %v978 = vunpack.c.l.b16 %v119
    %v979 = vunpack.c.l.b16 %v120
    %v980 = vunpack.c.l.b16 %v121
    %v981 = vunpack.c.l.b16 %v122
    %v982 = vunpack.c.l.b16 %v123
    %v983 = vunpack.c.l.b16 %v124
    %v984 = vunpack.c.l.b16 %v125
    %v985 = vunpack.c.l.b16 %v126
    %v986 = vunpack.c.l.b16 %v127
    %v987 = vunpack.c.l.b16 %v128
    %v988 = vunpack.c.l.b16 %v129
    %v989 = vunpack.c.l.b16 %v130
    %v990 = vunpack.c.l.b16 %v131
    %v991 = vunpack.c.l.b16 %v132
    %v992 = vunpack.c.l.b16 %v133
    %v993 = vunpack.c.l.b16 %v134
    %v994 = vunpack.c.l.b16 %v135
    %v995 = vunpack.c.l.b16 %v136
    %v996 = vunpack.c.l.b16 %v137
    %v997 = vunpack.c.l.b16 %v138
    %v998 = vunpack.c.l.b16 %v139
    %v999 = vunpack.c.l.b16 %v140
    %v1000 = vunpack.c.l.b16 %v141
    %v1001 = vunpack.c.l.b16 %v142
    %v1002 = vunpack.c.l.b16 %v143
    %v1003 = vunpack.c.l.b16 %v144
    %v1004 = vunpack.c.l.b16 %v145
    %v1005 = vunpack.c.l.b16 %v146
    %v1006 = vunpack.c.l.b16 %v147
    %v1007 = vunpack.c.l.b16 %v148
    %v1008 = vunpack.c.l.b16 %v149
    %v1009 = vunpack.c.l.b16 %v150
    %v1010 = vunpack.c.l.b16 %v151
    %v1011 = vunpack.c.l.b16 %v152
    %v1012 = vunpack.c.l.b16 %v153
    %v1013 = vunpack.c.l.b16 %v154
    %v1014 = vunpack.c.l.b16 %v155
    %v1015 = vunpack.c.l.b16 %v156
    %v1016 = vunpack.c.l.b16 %v157
    %v1017 = vunpack.c.l.b16 %v158
    %v1018 = vunpack.c.l.b16 %v159
    %v1019 = vunpack.c.l.b16 %v160
    %v1020 = vunpack.c.l.b16 %v161
    %v1021 = vunpack.c.l.b16 %v162
    %v1022 = vunpack.c.l.b16 %v163
    %v1023 = vunpack.c.l.b16 %v164
    %v1024 = vunpack.c.l.b16 %v165
    %v1025 = vunpack.c.l.b16 %v166
    %v1026 = vunpack.c.l.b16 %v167
    %v1027 = vunpack.c.l.b16 %v168
    %v1028 = vunpack.c.l.b16 %v169
    %v1029 = vunpack.c.l.b16 %v170
    %v1030 = vunpack.c.l.b16 %v171
    %v1031 = vunpack.c.l.b16 %v172
    %v1032 = vunpack.c.l.b16 %v173
    %v1033 = vunpack.c.l.b16 %v174
    %v1034 = vunpack.c.l.b16 %v175
    %v1035 = vunpack.c.l.b16 %v176
    %v1036 = vunpack.c.l.b16 %v177
    %v1037 = vunpack.c.l.b16 %v178
    %v1038 = vunpack.c.l.b16 %v179
    %v1039 = vunpack.c.l.b16 %v180
    %v1040 = vunpack.c.l.b16 %v181
    %v1041 = vunpack.c.l.b16 %v182
    %v1042 = vunpack.c.l.b16 %v183
    %v1043 = vunpack.c.l.b16 %v184
    %v1044 = vunpack.c.l.b16 %v185
    %v1045 = vunpack.c.l.b16 %v186
    %v1046 = vunpack.c.l.b16 %v187
    %v1047 = vunpack.c.l.b16 %v188
    %v1048 = vunpack.c.l.b16 %v189
    %v1049 = vunpack.c.l.b16 %v190
    %v1050 = vunpack.c.l.b16 %v191
    %v1051 = vunpack.c.l.b16 %v192
    %v1052 = vunpack.c.l.b16 %v193
    %v1053 = vunpack.c.l.b16 %v194
    %v1054 = vunpack.c.l.b16 %v195
    %v1055 = vunpack.c.l.b16 %v196
    %v1056 = vunpack.c.l.b16 %v197
    %v1057 = vunpack.c.l.b16 %v198
    %v1058 = vunpack.c.l.b16 %v199
    %v1059 = vunpack.c.l.b16 %v200
    %v1060 = vunpack.c.l.b16 %v201
    %v1061 = vunpack.c.l.b16 %v202
    %v1062 = vunpack.c.l.b16 %v203
    %v1063 = vunpack.c.l.b16 %v204
    %v1064 = vunpack.c.l.b16 %v205
    %v1065 = vunpack.c.l.b16 %v206
    %v1066 = vunpack.c.l.b16 %v207
    %v1067 = vunpack.c.l.b16 %v208
    %v1068 = vunpack.c.l.b16 %v209
    %v1069 = vunpack.c.l.b16 %v210
    %v1070 = vunpack.c.l.b16 %v211
    %v1071 = vunpack.c.l.b16 %v212
    %v1072 = vunpack.c.l.b16 %v213
    %v1073 = vunpack.c.l.b16 %v214
    %v1074 = vunpack.c.l.b16 %v215
    %v1075 = vunpack.c.l.b16 %v216
    %v1076 = vunpack.c.l.b16 %v217
    %v1077 = vunpack.c.l.b16 %v218
    %v1078 = vunpack.c.l.b16 %v219
    %v1079 = vunpack.c.l.b16 %v220
    %v1080 = vunpack.c.l.b16 %v221
    %v1081 = vunpack.c.l.b16 %v222
    %v1082 = vunpack.c.l.b16 %v223
    %v1083 = vunpack.c.l.b16 %v224
    %v1084 = vunpack.c.l.b16 %v225
    %v1085 = vunpack.c.l.b16 %v226
    %v1086 = vunpack.c.l.b16 %v227
    %v1087 = vunpack.c.l.b16 %v228
    %v1088 = vunpack.c.l.b16 %v229
    %v1089 = vunpack.c.l.b16 %v230
    %v1090 = vunpack.c.l.b16 %v231
    %v1091 = vunpack.c.l.b16 %v232
    %v1092 = vunpack.c.l.b16 %v233
    %v1093 = vunpack.c.l.b16 %v234
    %v1094 = vunpack.c.l.b16 %v235
    %v1095 = vunpack.c.l.b16 %v236
    %v1096 = vunpack.c.l.b16 %v237
    %v1097 = vunpack.c.l.b16 %v238
    %v1098 = vunpack.c.l.b16 %v239
    %v1099 = vunpack.c.l.b16 %v240
    %v1100 = vunpack.c.l.b16 %v241
    %v1101 = vunpack.c.l.b16 %v242
    %v1102 = vunpack.c.l.b16 %v243
    %v1103 = vunpack.c.l.b16 %v244
    %v1104 = vunpack.c.l.b16 %v245
    %v1105 = vunpack.c.l.b16 %v246
    %v1106 = vunpack.c.l.b16 %v247
    %v1107 = vunpack.c.l.b16 %v248
    %v1108 = vunpack.c.l.b16 %v249
    %v1109 = vunpack.c.l.b16 %v250
    %v1110 = vunpack.c.l.b16 %v251
    %v1111 = vunpack.c.l.b16 %v252
    %v1112 = vunpack.c.l.b16 %v253
    %v1113 = vunpack.c.l.b16 %v254
    %v1114 = vunpack.c.l.b16 %v255
    %v1115 = vunpack.c.l.b16 %v256
    %v1116 = vunpack.c.l.b16 %v257
    %v1117 = vunpack.c.l.b16 %v258
    %v1118 = vunpack.c.l.b16 %v259
    %v1119 = vunpack.c.l.b16 %v260
    %v1120 = vunpack.c.l.b16 %v261
    %v1121 = vunpack.c.l.b16 %v262
    %v1122 = vunpack.c.l.b16 %v263
    %v1123 = vunpack.c.l.b16 %v264
    %v1124 = vunpack.c.l.b16 %v265
    %v1125 = vunpack.c.l.b16 %v266
    %v1126 = vunpack.c.l.b16 %v267
    %v1127 = vunpack.c.l.b16 %v268
    %v1128 = vunpack.c.l.b16 %v269
    %v1129 = vunpack.c.l.b16 %v270
    %v1130 = vunpack.c.l.b16 %v271
    %v1131 = vunpack.c.l.b16 %v272
    %v1132 = vunpack.c.l.b16 %v273
    %v1133 = vunpack.c.l.b16 %v274
    %v1134 = vunpack.c.l.b16 %v275
    %v1135 = vunpack.c.l.b16 %v276
    %v1136 = vunpack.c.l.b16 %v277
    %v1137 = vunpack.c.l.b16 %v278
    %v1138 = vunpack.c.l.b16 %v279
    %v1139 = vunpack.c.l.b16 %v280
    %v1140 = vunpack.c.l.b16 %v281
    %v1141 = vunpack.c.l.b16 %v282
    %v1142 = vunpack.c.l.b16 %v283
    %v1143 = vunpack.c.l.b16 %v284
    %v1144 = vunpack.c.l.b16 %v285
    %v1145 = vunpack.c.l.b16 %v286
    %v1146 = vunpack.c.l.b16 %v287
    %v1147 = vunpack.c.l.b16 %v288
    %v1148 = vunpack.c.l.b16 %v289
    %v1149 = vunpack.c.l.b16 %v290
    %v1150 = vunpack.c.l.b16 %v291
    %v1151 = vunpack.c.l.b16 %v292
    %v1152 = vunpack.c.l.b16 %v293
    %v1153 = vunpack.c.l.b16 %v294
    %v1154 = vunpack.c.l.b16 %v295
    %v1155 = vunpack.c.l.b16 %v296
    %v1156 = vunpack.c.l.b16 %v297
    %v1157 = vunpack.c.l.b16 %v298
    %v1158 = vunpack.c.l.b16 %v299
    %v1159 = vunpack.c.l.b16 %v300
    %v1160 = vunpack.c.l.b16 %v301
    %v1161 = vunpack.c.l.b16 %v302
    %v1162 = vunpack.c.l.b16 %v303
    %v1163 = vunpack.c.l.b16 %v304
    %v1164 = vunpack.c.l.b16 %v305
    %v1165 = vunpack.c.l.b16 %v306
    %v1166 = vunpack.c.l.b16 %v307
    %v1167 = vunpack.c.l.b16 %v308
    %v1168 = vunpack.c.l.b16 %v309
    %v1169 = vunpack.c.l.b16 %v310
    %v1170 = vunpack.c.l.b16 %v311
    %v1171 = vunpack.c.l.b16 %v312
    %v1172 = vunpack.c.l.b16 %v313
    %v1173 = vunpack.c.l.b16 %v314
    %v1174 = vunpack.c.l.b16 %v315
    %v1175 = vunpack.c.l.b16 %v316
    %v1176 = vunpack.c.l.b16 %v317
    %v1177 = vunpack.c.l.b16 %v318
    %v1178 = vunpack.c.l.b16 %v319
    %v1179 = vunpack.c.l.b16 %v320
    %v1180 = vunpack.c.l.b16 %v321
    %v1181 = vunpack.c.l.b16 %v322
    %v1182 = vunpack.c.l.b16 %v323
    %v1183 = vunpack.c.l.b16 %v324
    %v1184 = vunpack.c.l.b16 %v325
    %v1185 = vunpack.c.l.b16 %v326
    %v1186 = vunpack.c.l.b16 %v327
    %v1187 = vunpack.c.l.b16 %v328
    %v1188 = vunpack.c.l.b16 %v329
    %v1189 = vunpack.c.l.b16 %v330
    %v1190 = vunpack.c.l.b16 %v331
    %v1191 = vunpack.c.l.b16 %v332
    %v1192 = vunpack.c.l.b16 %v333
    %v1193 = vunpack.c.l.b16 %v334
    %v1194 = vunpack.c.l.b16 %v335
    %v1195 = vunpack.c.l.b16 %v336
    %v1196 = vunpack.c.l.b16 %v337
    %v1197 = vunpack.c.l.b16 %v338
    %v1198 = vunpack.c.l.b16 %v339
    %v1199 = vunpack.c.l.b16 %v340
    %v1200 = vunpack.c.l.b16 %v341
    %v1201 = vunpack.c.l.b16 %v342
    %v1202 = vunpack.c.l.b16 %v343
    %v1203 = vunpack.c.l.b16 %v344
    %v1204 = vunpack.c.l.b16 %v345
    %v1205 = vunpack.c.l.b16 %v346
    %v1206 = vunpack.c.l.b16 %v347
    %v1207 = vunpack.c.l.b16 %v348
    %v1208 = vunpack.c.l.b16 %v349
    %v1209 = vunpack.c.l.b16 %v350
    %v1210 = vunpack.c.l.b16 %v351
    %v1211 = vunpack.c.l.b16 %v352
    %v1212 = vunpack.c.l.b16 %v353
    %v1213 = vunpack.c.l.b16 %v354
    %v1214 = vunpack.c.l.b16 %v355
    %v1215 = vunpack.c.l.b16 %v356
    %v1216 = vunpack.c.l.b16 %v357
    %v1217 = vunpack.c.l.b16 %v358
    %v1218 = vunpack.c.l.b16 %v359
    %v1219 = vunpack.c.l.b16 %v360
    %v1220 = vunpack.c.l.b16 %v361
    %v1221 = vunpack.c.l.b16 %v362
    %v1222 = vunpack.c.l.b16 %v363
    %v1223 = vunpack.c.l.b16 %v364
    %v1224 = vunpack.c.l.b16 %v365
    %v1225 = vunpack.c.l.b16 %v366
    %v1226 = vunpack.c.l.b16 %v367
    %v1227 = vunpack.c.l.b16 %v368
    %v1228 = vunpack.c.l.b16 %v369
    %v1229 = vunpack.c.l.b16 %v370
    %v1230 = vunpack.c.l.b16 %v371
    %v1231 = vunpack.c.l.b16 %v372
    %v1232 = vunpack.c.l.b16 %v373
    %v1233 = vunpack.c.l.b16 %v374
    %v1234 = vunpack.c.l.b16 %v375
    %v1235 = vunpack.c.l.b16 %v376
    %v1236 = vunpack.c.l.b16 %v377
    %v1237 = vunpack.c.l.b16 %v378
    %v1238 = vunpack.c.l.b16 %v379
    %v1239 = vunpack.c.l.b16 %v380
    %v1240 = vunpack.c.l.b16 %v381
    %v1241 = vunpack.c.l.b16 %v382
    %v1242 = vunpack.c.l.b16 %v383
    %v1243 = vunpack.c.l.b16 %v384
    %v1244 = vunpack.c.l.b16 %v385
    %v1245 = vunpack.c.l.b16 %v386
    %v1246 = vunpack.c.l.b16 %v387
    %v1247 = vunpack.c.l.b16 %v388
    %v1248 = vunpack.c.l.b16 %v389
    %v1249 = vunpack.c.l.b16 %v390
    %v1250 = vunpack.c.l.b16 %v391
    %v1251 = vunpack.c.l.b16 %v392
    %v1252 = vunpack.c.l.b16 %v393
    %v1253 = vunpack.c.l.b16 %v394
    %v1254 = vunpack.c.l.b16 %v395
    %v1255 = vunpack.c.l.b16 %v396
    %v1256 = vunpack.c.l.b16 %v397
    %v1257 = vunpack.c.l.b16 %v398
    %v1258 = vunpack.c.l.b16 %v399
    %v1259 = vunpack.c.l.b16 %v400
    %v1260 = vunpack.c.l.b16 %v401
    %v1261 = vunpack.c.l.b16 %v402
    %v1262 = vunpack.c.l.b16 %v403
    %v1263 = vunpack.c.l.b16 %v404
    %v1264 = vunpack.c.l.b16 %v405
    %v1265 = vunpack.c.l.b16 %v406
    %v1266 = vunpack.c.l.b16 %v407
    %v1267 = vunpack.c.l.b16 %v408
    %v1268 = vunpack.c.l.b16 %v409
    %v1269 = vunpack.c.l.b16 %v410
    %v1270 = vunpack.c.l.b16 %v411
    %v1271 = vunpack.c.l.b16 %v412
    %v1272 = vunpack.c.l.b16 %v413
    %v1273 = vunpack.c.l.b16 %v414
    %v1274 = vunpack.c.l.b16 %v415
    %v1275 = vunpack.c.l.b16 %v416
    %v1276 = vunpack.c.l.b16 %v417
    %v1277 = vunpack.c.l.b16 %v418
    %v1278 = vunpack.c.l.b16 %v419
    %v1279 = vunpack.c.l.b16 %v420
    %v1280 = vunpack.c.l.b16 %v421
    %v1281 = vunpack.c.l.b16 %v422
    %v1282 = vunpack.c.l.b16 %v423
    %v1283 = vunpack.c.l.b16 %v424
    %v1284 = vunpack.c.l.b16 %v425
    %v1285 = vunpack.c.l.b16 %v426
    %v1286 = vunpack.c.l.b16 %v427
    %v1287 = vunpack.c.l.b16 %v428
    %v1288 = vunpack.c.l.b16 %v429
    %v1289 = vpack.c.b16 %v906, %v905
    %v1290 = vpack.c.b16 %v908, %v907
    %v1291 = vpack.c.b16 %v910, %v909
    %v1292 = vpack.c.b16 %v912, %v911
    %v1293 = vpack.c.b16 %v914, %v913
    %v1294 = vpack.c.b16 %v916, %v915
    %v1295 = vpack.c.b16 %v918, %v917
    %v1296 = vpack.c.b16 %v920, %v919
    %v1297 = vpack.c.b16 %v922, %v921
    %v1298 = vpack.c.b16 %v924, %v923
    %v1299 = vpack.c.b16 %v926, %v925
    %v1300 = vpack.c.b16 %v928, %v927
    %v1301 = vpack.c.b16 %v930, %v929
    %v1302 = vpack.c.b16 %v932, %v931
    %v1303 = vpack.c.b16 %v934, %v933
    %v1304 = vpack.c.b16 %v936, %v935
    %v1305 = vpack.c.b16 %v938, %v937
    %v1306 = vpack.c.b16 %v940, %v939
    %v1307 = vpack.c.b16 %v942, %v941
    %v1308 = vpack.c.b16 %v944, %v943
    %v1309 = vpack.c.b16 %v946, %v945
    %v1310 = vpack.c.b16 %v948, %v947
    %v1311 = vpack.c.b16 %v950, %v949
    %v1312 = vpack.c.b16 %v952, %v951
    %v1313 = vpack.c.b16 %v954, %v953
    %v1314 = vpack.c.b16 %v956, %v955
    %v1315 = vpack.c.b16 %v958, %v957
    %v1316 = vpack.c.b16 %v960, %v959
    %v1317 = vpack.c.b16 %v962, %v961
    %v1318 = vpack.c.b16 %v964, %v963
    %v1319 = vpack.c.b16 %v966, %v965
    %v1320 = vpack.c.b16 %v968, %v967
    %v1321 = vpack.c.b16 %v970, %v969
    %v1322 = vpack.c.b16 %v972, %v971
    %v1323 = vpack.c.b16 %v974, %v973
    %v1324 = vpack.c.b16 %v976, %v975
    %v1325 = vpack.c.b16 %v978, %v977
    %v1326 = vpack.c.b16 %v980, %v979
    %v1327 = vpack.c.b16 %v982, %v981
    %v1328 = vpack.c.b16 %v984, %v983
    %v1329 = vpack.c.b16 %v986, %v985
    %v1330 = vpack.c.b16 %v988, %v987
    %v1331 = vpack.c.b16 %v990, %v989
    %v1332 = vpack.c.b16 %v992, %v991
    %v1333 = vpack.c.b16 %v994, %v993
    %v1334 = vpack.c.b16 %v996, %v995
    %v1335 = vpack.c.b16 %v998, %v997
    %v1336 = vpack.c.b16 %v1000, %v999
    %v1337 = vpack.c.b16 %v1002, %v1001
    %v1338 = vpack.c.b16 %v1004, %v1003
    %v1339 = vpack.c.b16 %v1006, %v1005
    %v1340 = vpack.c.b16 %v1008, %v1007
    %v1341 = vpack.c.b16 %v1010, %v1009
    %v1342 = vpack.c.b16 %v1012, %v1011
    %v1343 = vpack.c.b16 %v1014, %v1013
    %v1344 = vpack.c.b16 %v1016, %v1015
    %v1345 = vpack.c.b16 %v1018, %v1017
    %v1346 = vpack.c.b16 %v1020, %v1019
    %v1347 = vpack.c.b16 %v1022, %v1021
    %v1348 = vpack.c.b16 %v1024, %v1023
    %v1349 = vpack.c.b16 %v1026, %v1025
    %v1350 = vpack.c.b16 %v1028, %v1027
    %v1351 = vpack.c.b16 %v1030, %v1029
    %v1352 = vpack.c.b16 %v1032, %v1031
    %v1353 = vpack.c.b16 %v1034, %v1033
    %v1354 = vpack.c.b16 %v1036, %v1035
    %v1355 = vpack.c.b16 %v1038, %v1037
    %v1356 = vpack.c.b16 %v1040, %v1039
    %v1357 = vpack.c.b16 %v1042, %v1041
    %v1358 = vpack.c.b16 %v1044, %v1043
    %v1359 = vpack.c.b16 %v1046, %v1045
    %v1360 = vpack.c.b16 %v1048, %v1047
    %v1361 = vpack.c.b16 %v1050, %v1049
    %v1362 = vpack.c.b16 %v1052, %v1051
    %v1363 = vpack.c.b16 %v1054, %v1053
    %v1364 = vpack.c.b16 %v1056, %v1055
    %v1365 = vpack.c.b16 %v1058, %v1057
    %v1366 = vpack.c.b16 %v1060, %v1059
    %v1367 = vpack.c.b16 %v1062, %v1061
    %v1368 = vpack.c.b16 %v1064, %v1063
    %v1369 = vpack.c.b16 %v1066, %v1065
    %v1370 = vpack.c.b16 %v1068, %v1067
    %v1371 = vpack.c.b16 %v1070, %v1069
    %v1372 = vpack.c.b16 %v1072, %v1071
    %v1373 = vpack.c.b16 %v1074, %v1073
    %v1374 = vpack.c.b16 %v1076, %v1075
    %v1375 = vpack.c.b16 %v1078, %v1077
    %v1376 = vpack.c.b16 %v1080, %v1079
    %v1377 = vpack.c.b16 %v1082, %v1081
    %v1378 = vpack.c.b16 %v1084, %v1083
    %v1379 = vpack.c.b16 %v1086, %v1085
    %v1380 = vpack.c.b16 %v1088, %v1087
    %v1381 = vpack.c.b16 %v1090, %v1089
    %v1382 = vpack.c.b16 %v1092, %v1091
    %v1383 = vpack.c.b16 %v1094, %v1093
    %v1384 = vpack.c.b16 %v1096, %v1095
    %v1385 = vpack.c.b16 %v1098, %v1097
    %v1386 = vpack.c.b16 %v1100, %v1099
    %v1387 = vpack.c.b16 %v1102, %v1101
    %v1388 = vpack.c.b16 %v1104, %v1103
    %v1389 = vpack.c.b16 %v1106, %v1105
    %v1390 = vpack.c.b16 %v1108, %v1107
    %v1391 = vpack.c.b16 %v1110, %v1109
    %v1392 = vpack.c.b16 %v1112, %v1111
    %v1393 = vpack.c.b16 %v1114, %v1113
    %v1394 = vpack.c.b16 %v1116, %v1115
    %v1395 = vpack.c.b16 %v1118, %v1117
    %v1396 = vpack.c.b16 %v1120, %v1119
    %v1397 = vpack.c.b16 %v1122, %v1121
    %v1398 = vpack.c.b16 %v1124, %v1123
    %v1399 = vpack.c.b16 %v1126, %v1125
    %v1400 = vpack.c.b16 %v1128, %v1127
    %v1401 = vpack.c.b16 %v1130, %v1129
    %v1402 = vpack.c.b16 %v1132, %v1131
    %v1403 = vpack.c.b16 %v1134, %v1133
    %v1404 = vpack.c.b16 %v1136, %v1135
    %v1405 = vpack.c.b16 %v1138, %v1137
    %v1406 = vpack.c.b16 %v1140, %v1139
    %v1407 = vpack.c.b16 %v1142, %v1141
    %v1408 = vpack.c.b16 %v1144, %v1143
    %v1409 = vpack.c.b16 %v1146, %v1145
    %v1410 = vpack.c.b16 %v1148, %v1147
    %v1411 = vpack.c.b16 %v1150, %v1149
    %v1412 = vpack.c.b16 %v1152, %v1151
    %v1413 = vpack.c.b16 %v1154, %v1153
    %v1414 = vpack.c.b16 %v1156, %v1155
    %v1415 = vpack.c.b16 %v1158, %v1157
    %v1416 = vpack.c.b16 %v1160, %v1159
    %v1417 = vpack.c.b16 %v1162, %v1161
    %v1418 = vpack.c.b16 %v1164, %v1163
    %v1419 = vpack.c.b16 %v1166, %v1165
    %v1420 = vpack.c.b16 %v1168, %v1167
    %v1421 = vpack.c.b16 %v1170, %v1169
    %v1422 = vpack.c.b16 %v1172, %v1171
    %v1423 = vpack.c.b16 %v1174, %v1173
    %v1424 = vpack.c.b16 %v1176, %v1175
    %v1425 = vpack.c.b16 %v1178, %v1177
    %v1426 = vpack.c.b16 %v1180, %v1179
    %v1427 = vpack.c.b16 %v1182, %v1181
    %v1428 = vpack.c.b16 %v1184, %v1183
    %v1429 = vpack.c.b16 %v1186, %v1185
    %v1430 = vpack.c.b16 %v1188, %v1187
    %v1431 = vpack.c.b16 %v1190, %v1189
    %v1432 = vpack.c.b16 %v1192, %v1191
    %v1433 = vpack.c.b16 %v1194, %v1193
    %v1434 = vpack.c.b16 %v1196, %v1195
    %v1435 = vpack.c.b16 %v1198, %v1197
    %v1436 = vpack.c.b16 %v1200, %v1199
    %v1437 = vpack.c.b16 %v1202, %v1201
    %v1438 = vpack.c.b16 %v1204, %v1203
    %v1439 = vpack.c.b16 %v1206, %v1205
    %v1440 = vpack.c.b16 %v1208, %v1207
    %v1441 = vpack.c.b16 %v1210, %v1209
    %v1442 = vpack.c.b16 %v1212, %v1211
    %v1443 = vpack.c.b16 %v1214, %v1213
    %v1444 = vpack.c.b16 %v1216, %v1215
    %v1445 = vpack.c.b16 %v1218, %v1217
    %v1446 = vpack.c.b16 %v1220, %v1219
    %v1447 = vpack.c.b16 %v1222, %v1221
    %v1448 = vpack.c.b16 %v1224, %v1223
    %v1449 = vpack.c.b16 %v1226, %v1225
    %v1450 = vpack.c.b16 %v1228, %v1227
    %v1451 = vpack.c.b16 %v1230, %v1229
    %v1452 = vpack.c.b16 %v1232, %v1231
    %v1453 = vpack.c.b16 %v1234, %v1233
    %v1454 = vpack.c.b16 %v1236, %v1235
    %v1455 = vpack.c.b16 %v1238, %v1237
    %v1456 = vpack.c.b16 %v1240, %v1239
    %v1457 = vpack.c.b16 %v1242, %v1241
    %v1458 = vpack.c.b16 %v1244, %v1243
    %v1459 = vpack.c.b16 %v1246, %v1245
    %v1460 = vpack.c.b16 %v1248, %v1247
    %v1461 = vpack.c.b16 %v1250, %v1249
    %v1462 = vpack.c.b16 %v1252, %v1251
    %v1463 = vpack.c.b16 %v1254, %v1253
    %v1464 = vpack.c.b16 %v1256, %v1255
    %v1465 = vpack.c.b16 %v1258, %v1257
    %v1466 = vpack.c.b16 %v1260, %v1259
    %v1467 = vpack.c.b16 %v1262, %v1261
    %v1468 = vpack.c.b16 %v1264, %v1263
    %v1469 = vpack.c.b16 %v1266, %v1265
    %v1470 = vpack.c.b16 %v1268, %v1267
    %v1471 = vpack.c.b16 %v1270, %v1269
    %v1472 = vpack.c.b16 %v1272, %v1271
    %v1473 = vpack.c.b16 %v1274, %v1273
    %v1474 = vpack.c.b16 %v1276, %v1275
    %v1475 = vpack.c.b16 %v1278, %v1277
    %v1476 = vpack.c.b16 %v1280, %v1279
    %v1477 = vpack.c.b16 %v1282, %v1281
    %v1478 = vpack.c.b16 %v1284, %v1283
    %v1479 = vpack.c.b16 %v1286, %v1285
    %v1480 = vpack.c.b16 %v1288, %v1287
    %1673 = vmatprep.subr.bf16.mxu0 0
    %1674 = vmatpush1.bf16.msra.mxu0 %v1289
    %1675 = vmatprep.subr.bf16.mxu0 0
    %1676 = vmatpush1.bf16.msra.mxu0 %v1290
    %1677 = vmatprep.subr.bf16.mxu0 0
    %1678 = vmatpush1.bf16.msra.mxu0 %v1291
    %1679 = vmatprep.subr.bf16.mxu0 0
    %1680 = vmatpush1.bf16.msra.mxu0 %v1292
    %1681 = vmatprep.subr.bf16.mxu0 0
    %1682 = vmatpush1.bf16.msra.mxu0 %v1293
    %1683 = vmatprep.subr.bf16.mxu0 0
    %1684 = vmatpush1.bf16.msra.mxu0 %v1294
    %1685 = vmatprep.subr.bf16.mxu0 0
    %1686 = vmatpush1.bf16.msra.mxu0 %v1295
    %1687 = vmatprep.subr.bf16.mxu0 0
    %1688 = vmatpush1.bf16.msra.mxu0 %v1296
    %1689 = vmatprep.subr.bf16.mxu0 0
    %1690 = vmatpush1.bf16.msra.mxu0 %v1297
    %1691 = vmatprep.subr.bf16.mxu0 0
    %1692 = vmatpush1.bf16.msra.mxu0 %v1298
    %1693 = vmatprep.subr.bf16.mxu0 0
    %1694 = vmatpush1.bf16.msra.mxu0 %v1299
    %1695 = vmatprep.subr.bf16.mxu0 0
    %1696 = vmatpush1.bf16.msra.mxu0 %v1300
    %1697 = vmatprep.subr.bf16.mxu0 0
    %1698 = vmatpush1.bf16.msra.mxu0 %v1301
    %1699 = vmatprep.subr.bf16.mxu0 0
    %1700 = vmatpush1.bf16.msra.mxu0 %v1302
    %1701 = vmatprep.subr.bf16.mxu0 0
    %1702 = vmatpush1.bf16.msra.mxu0 %v1303
    %1703 = vmatprep.subr.bf16.mxu0 0
    %1704 = vmatpush1.bf16.msra.mxu0 %v1304
    %1705 = vmatprep.mubr.bf16.mxu0 %v474
    %1706 = vmatmul.mubr.bf16.gmra.mrb[0].mxu0 %v473
    %v1707 = vpop.f32.mrb[0].mxu0
    %v1708 = vadd.f32 %v435, %v1707
    %v1709 = vpop.f32.mrb[0].mxu0
    %v1710 = vpop.f32.mrb[0].mxu0
    %v1711 = vpop.f32.mrb[0].mxu0
    %1712 = vdwg.mxu0
    %1713 = vmatprep.subr.bf16.mxu0 0
    %1714 = vmatpush1.bf16.msra.mxu0 %v1305
    %1715 = vmatprep.subr.bf16.mxu0 0
    %1716 = vmatpush1.bf16.msra.mxu0 %v1306
    %1717 = vmatprep.subr.bf16.mxu0 0
    %1718 = vmatpush1.bf16.msra.mxu0 %v1307
    %1719 = vmatprep.subr.bf16.mxu0 0
    %1720 = vmatpush1.bf16.msra.mxu0 %v1308
    %1721 = vmatprep.subr.bf16.mxu0 0
    %1722 = vmatpush1.bf16.msra.mxu0 %v1309
    %1723 = vmatprep.subr.bf16.mxu0 0
    %1724 = vmatpush1.bf16.msra.mxu0 %v1310
    %1725 = vmatprep.subr.bf16.mxu0 0
    %1726 = vmatpush1.bf16.msra.mxu0 %v1311
    %1727 = vmatprep.subr.bf16.mxu0 0
    %1728 = vmatpush1.bf16.msra.mxu0 %v1312
    %1729 = vmatprep.subr.bf16.mxu0 0
    %1730 = vmatpush1.bf16.msra.mxu0 %v1313
    %1731 = vmatprep.subr.bf16.mxu0 0
    %1732 = vmatpush1.bf16.msra.mxu0 %v1314
    %1733 = vmatprep.subr.bf16.mxu0 0
    %1734 = vmatpush1.bf16.msra.mxu0 %v1315
    %1735 = vmatprep.subr.bf16.mxu0 0
    %1736 = vmatpush1.bf16.msra.mxu0 %v1316
    %1737 = vmatprep.subr.bf16.mxu0 0
    %1738 = vmatpush1.bf16.msra.mxu0 %v1317
    %1739 = vmatprep.subr.bf16.mxu0 0
    %1740 = vmatpush1.bf16.msra.mxu0 %v1318
    %1741 = vmatprep.subr.bf16.mxu0 0
    %1742 = vmatpush1.bf16.msra.mxu0 %v1319
    %1743 = vmatprep.subr.bf16.mxu0 0
    %1744 = vmatpush1.bf16.msra.mxu0 %v1320
    %1745 = vmatprep.mubr.bf16.mxu0 %v476
    %1746 = vmatmul.mubr.bf16.gmra.mrb[0].mxu0 %v475
    %v1747 = vpop.f32.mrb[0].mxu0
    %v1748 = vadd.f32 %v1708, %v1747
    %v1749 = vpop.f32.mrb[0].mxu0
    %v1750 = vpop.f32.mrb[0].mxu0
    %v1751 = vpop.f32.mrb[0].mxu0
    %1752 = vdwg.mxu0
    %1753 = vmatprep.subr.bf16.mxu0 0
    %1754 = vmatpush1.bf16.msra.mxu0 %v1321
    %1755 = vmatprep.subr.bf16.mxu0 0
    %1756 = vmatpush1.bf16.msra.mxu0 %v1322
    %1757 = vmatprep.subr.bf16.mxu0 0
    %1758 = vmatpush1.bf16.msra.mxu0 %v1323
    %1759 = vmatprep.subr.bf16.mxu0 0
    %1760 = vmatpush1.bf16.msra.mxu0 %v1324
    %1761 = vmatprep.subr.bf16.mxu0 0
    %1762 = vmatpush1.bf16.msra.mxu0 %v1325
    %1763 = vmatprep.subr.bf16.mxu0 0
    %1764 = vmatpush1.bf16.msra.mxu0 %v1326
    %1765 = vmatprep.subr.bf16.mxu0 0
    %1766 = vmatpush1.bf16.msra.mxu0 %v1327
    %1767 = vmatprep.subr.bf16.mxu0 0
    %1768 = vmatpush1.bf16.msra.mxu0 %v1328
    %1769 = vmatprep.subr.bf16.mxu0 0
    %1770 = vmatpush1.bf16.msra.mxu0 %v1329
    %1771 = vmatprep.subr.bf16.mxu0 0
    %1772 = vmatpush1.bf16.msra.mxu0 %v1330
    %1773 = vmatprep.subr.bf16.mxu0 0
    %1774 = vmatpush1.bf16.msra.mxu0 %v1331
    %1775 = vmatprep.subr.bf16.mxu0 0
    %1776 = vmatpush1.bf16.msra.mxu0 %v1332
    %1777 = vmatprep.subr.bf16.mxu0 0
    %1778 = vmatpush1.bf16.msra.mxu0 %v1333
    %1779 = vmatprep.subr.bf16.mxu0 0
    %1780 = vmatpush1.bf16.msra.mxu0 %v1334
    %1781 = vmatprep.subr.bf16.mxu0 0
    %1782 = vmatpush1.bf16.msra.mxu0 %v1335
    %1783 = vmatprep.subr.bf16.mxu0 0
    %1784 = vmatpush1.bf16.msra.mxu0 %v1336
    %1785 = vmatprep.mubr.bf16.mxu0 %v478
    %1786 = vmatmul.mubr.bf16.gmra.mrb[0].mxu0 %v477
    %v1787 = vpop.f32.mrb[0].mxu0
    %v1788 = vadd.f32 %v1748, %v1787
    %v1789 = vpop.f32.mrb[0].mxu0
    %v1790 = vpop.f32.mrb[0].mxu0
    %v1791 = vpop.f32.mrb[0].mxu0
    %1792 = vdwg.mxu0
    %1793 = vmatprep.subr.bf16.mxu0 0
    %1794 = vmatpush1.bf16.msra.mxu0 %v1337
    %1795 = vmatprep.subr.bf16.mxu0 0
    %1796 = vmatpush1.bf16.msra.mxu0 %v1338
    %1797 = vmatprep.subr.bf16.mxu0 0
    %1798 = vmatpush1.bf16.msra.mxu0 %v1339
    %1799 = vmatprep.subr.bf16.mxu0 0
    %1800 = vmatpush1.bf16.msra.mxu0 %v1340
    %1801 = vmatprep.subr.bf16.mxu0 0
    %1802 = vmatpush1.bf16.msra.mxu0 %v1341
    %1803 = vmatprep.subr.bf16.mxu0 0
    %1804 = vmatpush1.bf16.msra.mxu0 %v1342
    %1805 = vmatprep.subr.bf16.mxu0 0
    %1806 = vmatpush1.bf16.msra.mxu0 %v1343
    %1807 = vmatprep.subr.bf16.mxu0 0
    %1808 = vmatpush1.bf16.msra.mxu0 %v1344
    %1809 = vmatprep.subr.bf16.mxu0 0
    %1810 = vmatpush1.bf16.msra.mxu0 %v1345
    %1811 = vmatprep.subr.bf16.mxu0 0
    %1812 = vmatpush1.bf16.msra.mxu0 %v1346
    %1813 = vmatprep.subr.bf16.mxu0 0
    %1814 = vmatpush1.bf16.msra.mxu0 %v1347
    %1815 = vmatprep.subr.bf16.mxu0 0
    %1816 = vmatpush1.bf16.msra.mxu0 %v1348
    %1817 = vmatprep.subr.bf16.mxu0 0
    %1818 = vmatpush1.bf16.msra.mxu0 %v1349
    %1819 = vmatprep.subr.bf16.mxu0 0
    %1820 = vmatpush1.bf16.msra.mxu0 %v1350
    %1821 = vmatprep.subr.bf16.mxu0 0
    %1822 = vmatpush1.bf16.msra.mxu0 %v1351
    %1823 = vmatprep.subr.bf16.mxu0 0
    %1824 = vmatpush1.bf16.msra.mxu0 %v1352
    %1825 = vmatprep.mubr.bf16.mxu0 %v480
    %1826 = vmatmul.mubr.bf16.gmra.mrb[0].mxu0 %v479
    %v1827 = vpop.f32.mrb[0].mxu0
    %v1828 = vadd.f32 %v1788, %v1827
    %v1829 = vpop.f32.mrb[0].mxu0
    %v1830 = vpop.f32.mrb[0].mxu0
    %v1831 = vpop.f32.mrb[0].mxu0
    %1832 = vdwg.mxu0
    %1833 = vmatprep.subr.bf16.mxu0 0
    %1834 = vmatpush1.bf16.msra.mxu0 %v1353
    %1835 = vmatprep.subr.bf16.mxu0 0
    %1836 = vmatpush1.bf16.msra.mxu0 %v1354
    %1837 = vmatprep.subr.bf16.mxu0 0
    %1838 = vmatpush1.bf16.msra.mxu0 %v1355
    %1839 = vmatprep.subr.bf16.mxu0 0
    %1840 = vmatpush1.bf16.msra.mxu0 %v1356
    %1841 = vmatprep.subr.bf16.mxu0 0
    %1842 = vmatpush1.bf16.msra.mxu0 %v1357
    %1843 = vmatprep.subr.bf16.mxu0 0
    %1844 = vmatpush1.bf16.msra.mxu0 %v1358
    %1845 = vmatprep.subr.bf16.mxu0 0
    %1846 = vmatpush1.bf16.msra.mxu0 %v1359
    %1847 = vmatprep.subr.bf16.mxu0 0
    %1848 = vmatpush1.bf16.msra.mxu0 %v1360
    %1849 = vmatprep.subr.bf16.mxu0 0
    %1850 = vmatpush1.bf16.msra.mxu0 %v1361
    %1851 = vmatprep.subr.bf16.mxu0 0
    %1852 = vmatpush1.bf16.msra.mxu0 %v1362
    %1853 = vmatprep.subr.bf16.mxu0 0
    %1854 = vmatpush1.bf16.msra.mxu0 %v1363
    %1855 = vmatprep.subr.bf16.mxu0 0
    %1856 = vmatpush1.bf16.msra.mxu0 %v1364
    %1857 = vmatprep.subr.bf16.mxu0 0
    %1858 = vmatpush1.bf16.msra.mxu0 %v1365
    %1859 = vmatprep.subr.bf16.mxu0 0
    %1860 = vmatpush1.bf16.msra.mxu0 %v1366
    %1861 = vmatprep.subr.bf16.mxu0 0
    %1862 = vmatpush1.bf16.msra.mxu0 %v1367
    %1863 = vmatprep.subr.bf16.mxu0 0
    %1864 = vmatpush1.bf16.msra.mxu0 %v1368
    %1865 = vmatprep.mubr.bf16.mxu0 %v482
    %1866 = vmatmul.mubr.bf16.gmra.mrb[0].mxu0 %v481
    %v1867 = vpop.f32.mrb[0].mxu0
    %v1868 = vadd.f32 %v1828, %v1867
    %v1869 = vpop.f32.mrb[0].mxu0
    %v1870 = vpop.f32.mrb[0].mxu0
    %v1871 = vpop.f32.mrb[0].mxu0
    %1872 = vdwg.mxu0
    %1873 = vmatprep.subr.bf16.mxu0 0
    %1874 = vmatpush1.bf16.msra.mxu0 %v1369
    %1875 = vmatprep.subr.bf16.mxu0 0
    %1876 = vmatpush1.bf16.msra.mxu0 %v1370
    %1877 = vmatprep.subr.bf16.mxu0 0
    %1878 = vmatpush1.bf16.msra.mxu0 %v1371
    %1879 = vmatprep.subr.bf16.mxu0 0
    %1880 = vmatpush1.bf16.msra.mxu0 %v1372
    %1881 = vmatprep.subr.bf16.mxu0 0
    %1882 = vmatpush1.bf16.msra.mxu0 %v1373
    %1883 = vmatprep.subr.bf16.mxu0 0
    %1884 = vmatpush1.bf16.msra.mxu0 %v1374
    %1885 = vmatprep.subr.bf16.mxu0 0
    %1886 = vmatpush1.bf16.msra.mxu0 %v1375
    %1887 = vmatprep.subr.bf16.mxu0 0
    %1888 = vmatpush1.bf16.msra.mxu0 %v1376
    %1889 = vmatprep.subr.bf16.mxu0 0
    %1890 = vmatpush1.bf16.msra.mxu0 %v1377
    %1891 = vmatprep.subr.bf16.mxu0 0
    %1892 = vmatpush1.bf16.msra.mxu0 %v1378
    %1893 = vmatprep.subr.bf16.mxu0 0
    %1894 = vmatpush1.bf16.msra.mxu0 %v1379
    %1895 = vmatprep.subr.bf16.mxu0 0
    %1896 = vmatpush1.bf16.msra.mxu0 %v1380
    %1897 = vmatprep.subr.bf16.mxu0 0
    %1898 = vmatpush1.bf16.msra.mxu0 %v1381
    %1899 = vmatprep.subr.bf16.mxu0 0
    %1900 = vmatpush1.bf16.msra.mxu0 %v1382
    %1901 = vmatprep.subr.bf16.mxu0 0
    %1902 = vmatpush1.bf16.msra.mxu0 %v1383
    %1903 = vmatprep.subr.bf16.mxu0 0
    %1904 = vmatpush1.bf16.msra.mxu0 %v1384
    %1905 = vmatprep.mubr.bf16.mxu0 %v484
    %1906 = vmatmul.mubr.bf16.gmra.mrb[0].mxu0 %v483
    %v1907 = vpop.f32.mrb[0].mxu0
    %v1908 = vadd.f32 %v1868, %v1907
    %v1909 = vpop.f32.mrb[0].mxu0
    %v1910 = vpop.f32.mrb[0].mxu0
    %v1911 = vpop.f32.mrb[0].mxu0
    %1912 = vdwg.mxu0
    %1913 = vmatprep.subr.bf16.mxu0 0
    %1914 = vmatpush1.bf16.msra.mxu0 %v1385
    %1915 = vmatprep.subr.bf16.mxu0 0
    %1916 = vmatpush1.bf16.msra.mxu0 %v1386
    %1917 = vmatprep.subr.bf16.mxu0 0
    %1918 = vmatpush1.bf16.msra.mxu0 %v1387
    %1919 = vmatprep.subr.bf16.mxu0 0
    %1920 = vmatpush1.bf16.msra.mxu0 %v1388
    %1921 = vmatprep.subr.bf16.mxu0 0
    %1922 = vmatpush1.bf16.msra.mxu0 %v1389
    %1923 = vmatprep.subr.bf16.mxu0 0
    %1924 = vmatpush1.bf16.msra.mxu0 %v1390
    %1925 = vmatprep.subr.bf16.mxu0 0
    %1926 = vmatpush1.bf16.msra.mxu0 %v1391
    %1927 = vmatprep.subr.bf16.mxu0 0
    %1928 = vmatpush1.bf16.msra.mxu0 %v1392
    %1929 = vmatprep.subr.bf16.mxu0 0
    %1930 = vmatpush1.bf16.msra.mxu0 %v1393
    %1931 = vmatprep.subr.bf16.mxu0 0
    %1932 = vmatpush1.bf16.msra.mxu0 %v1394
    %1933 = vmatprep.subr.bf16.mxu0 0
    %1934 = vmatpush1.bf16.msra.mxu0 %v1395
    %1935 = vmatprep.subr.bf16.mxu0 0
    %1936 = vmatpush1.bf16.msra.mxu0 %v1396
    %1937 = vmatprep.subr.bf16.mxu0 0
    %1938 = vmatpush1.bf16.msra.mxu0 %v1397
    %1939 = vmatprep.subr.bf16.mxu0 0
    %1940 = vmatpush1.bf16.msra.mxu0 %v1398
    %1941 = vmatprep.subr.bf16.mxu0 0
    %1942 = vmatpush1.bf16.msra.mxu0 %v1399
    %1943 = vmatprep.subr.bf16.mxu0 0
    %1944 = vmatpush1.bf16.msra.mxu0 %v1400
    %1945 = vmatprep.mubr.bf16.mxu0 %v486
    %1946 = vmatmul.mubr.bf16.gmra.mrb[0].mxu0 %v485
    %v1947 = vpop.f32.mrb[0].mxu0
    %v1948 = vadd.f32 %v1908, %v1947
    %v1949 = vpop.f32.mrb[0].mxu0
    %v1950 = vpop.f32.mrb[0].mxu0
    %v1951 = vpop.f32.mrb[0].mxu0
    %1952 = vdwg.mxu0
    %1953 = vmatprep.subr.bf16.mxu0 0
    %1954 = vmatpush1.bf16.msra.mxu0 %v1401
    %1955 = vmatprep.subr.bf16.mxu0 0
    %1956 = vmatpush1.bf16.msra.mxu0 %v1402
    %1957 = vmatprep.subr.bf16.mxu0 0
    %1958 = vmatpush1.bf16.msra.mxu0 %v1403
    %1959 = vmatprep.subr.bf16.mxu0 0
    %1960 = vmatpush1.bf16.msra.mxu0 %v1404
    %1961 = vmatprep.subr.bf16.mxu0 0
    %1962 = vmatpush1.bf16.msra.mxu0 %v1405
    %1963 = vmatprep.subr.bf16.mxu0 0
    %1964 = vmatpush1.bf16.msra.mxu0 %v1406
    %1965 = vmatprep.subr.bf16.mxu0 0
    %1966 = vmatpush1.bf16.msra.mxu0 %v1407
    %1967 = vmatprep.subr.bf16.mxu0 0
    %1968 = vmatpush1.bf16.msra.mxu0 %v1408
    %1969 = vmatprep.subr.bf16.mxu0 0
    %1970 = vmatpush1.bf16.msra.mxu0 %v1409
    %1971 = vmatprep.subr.bf16.mxu0 0
    %1972 = vmatpush1.bf16.msra.mxu0 %v1410
    %1973 = vmatprep.subr.bf16.mxu0 0
    %1974 = vmatpush1.bf16.msra.mxu0 %v1411
    %1975 = vmatprep.subr.bf16.mxu0 0
    %1976 = vmatpush1.bf16.msra.mxu0 %v1412
    %1977 = vmatprep.subr.bf16.mxu0 0
    %1978 = vmatpush1.bf16.msra.mxu0 %v1413
    %1979 = vmatprep.subr.bf16.mxu0 0
    %1980 = vmatpush1.bf16.msra.mxu0 %v1414
    %1981 = vmatprep.subr.bf16.mxu0 0
    %1982 = vmatpush1.bf16.msra.mxu0 %v1415
    %1983 = vmatprep.subr.bf16.mxu0 0
    %1984 = vmatpush1.bf16.msra.mxu0 %v1416
    %1985 = vmatprep.mubr.bf16.mxu0 %v488
    %1986 = vmatmul.mubr.bf16.gmra.mrb[0].mxu0 %v487
    %v1987 = vpop.f32.mrb[0].mxu0
    %v1988 = vadd.f32 %v1948, %v1987
    %v1989 = vpop.f32.mrb[0].mxu0
    %v1990 = vpop.f32.mrb[0].mxu0
    %v1991 = vpop.f32.mrb[0].mxu0
    %1992 = vdwg.mxu0
    %1993 = vmatprep.subr.bf16.mxu0 0
    %1994 = vmatpush1.bf16.msra.mxu0 %v1417
    %1995 = vmatprep.subr.bf16.mxu0 0
    %1996 = vmatpush1.bf16.msra.mxu0 %v1418
    %1997 = vmatprep.subr.bf16.mxu0 0
    %1998 = vmatpush1.bf16.msra.mxu0 %v1419
    %1999 = vmatprep.subr.bf16.mxu0 0
    %2000 = vmatpush1.bf16.msra.mxu0 %v1420
    %2001 = vmatprep.subr.bf16.mxu0 0
    %2002 = vmatpush1.bf16.msra.mxu0 %v1421
    %2003 = vmatprep.subr.bf16.mxu0 0
    %2004 = vmatpush1.bf16.msra.mxu0 %v1422
    %2005 = vmatprep.subr.bf16.mxu0 0
    %2006 = vmatpush1.bf16.msra.mxu0 %v1423
    %2007 = vmatprep.subr.bf16.mxu0 0
    %2008 = vmatpush1.bf16.msra.mxu0 %v1424
    %2009 = vmatprep.subr.bf16.mxu0 0
    %2010 = vmatpush1.bf16.msra.mxu0 %v1425
    %2011 = vmatprep.subr.bf16.mxu0 0
    %2012 = vmatpush1.bf16.msra.mxu0 %v1426
    %2013 = vmatprep.subr.bf16.mxu0 0
    %2014 = vmatpush1.bf16.msra.mxu0 %v1427
    %2015 = vmatprep.subr.bf16.mxu0 0
    %2016 = vmatpush1.bf16.msra.mxu0 %v1428
    %2017 = vmatprep.subr.bf16.mxu0 0
    %2018 = vmatpush1.bf16.msra.mxu0 %v1429
    %2019 = vmatprep.subr.bf16.mxu0 0
    %2020 = vmatpush1.bf16.msra.mxu0 %v1430
    %2021 = vmatprep.subr.bf16.mxu0 0
    %2022 = vmatpush1.bf16.msra.mxu0 %v1431
    %2023 = vmatprep.subr.bf16.mxu0 0
    %2024 = vmatpush1.bf16.msra.mxu0 %v1432
    %2025 = vmatprep.mubr.bf16.mxu0 %v490
    %2026 = vmatmul.mubr.bf16.gmra.mrb[0].mxu0 %v489
    %v2027 = vpop.f32.mrb[0].mxu0
    %v2028 = vadd.f32 %v1988, %v2027
    %v2029 = vpop.f32.mrb[0].mxu0
    %v2030 = vpop.f32.mrb[0].mxu0
    %v2031 = vpop.f32.mrb[0].mxu0
    %2032 = vdwg.mxu0
    %2033 = vmatprep.subr.bf16.mxu0 0
    %2034 = vmatpush1.bf16.msra.mxu0 %v1433
    %2035 = vmatprep.subr.bf16.mxu0 0
    %2036 = vmatpush1.bf16.msra.mxu0 %v1434
    %2037 = vmatprep.subr.bf16.mxu0 0
    %2038 = vmatpush1.bf16.msra.mxu0 %v1435
    %2039 = vmatprep.subr.bf16.mxu0 0
    %2040 = vmatpush1.bf16.msra.mxu0 %v1436
    %2041 = vmatprep.subr.bf16.mxu0 0
    %2042 = vmatpush1.bf16.msra.mxu0 %v1437
    %2043 = vmatprep.subr.bf16.mxu0 0
    %2044 = vmatpush1.bf16.msra.mxu0 %v1438
    %2045 = vmatprep.subr.bf16.mxu0 0
    %2046 = vmatpush1.bf16.msra.mxu0 %v1439
    %2047 = vmatprep.subr.bf16.mxu0 0
    %2048 = vmatpush1.bf16.msra.mxu0 %v1440
    %2049 = vmatprep.subr.bf16.mxu0 0
    %2050 = vmatpush1.bf16.msra.mxu0 %v1441
    %2051 = vmatprep.subr.bf16.mxu0 0
    %2052 = vmatpush1.bf16.msra.mxu0 %v1442
    %2053 = vmatprep.subr.bf16.mxu0 0
    %2054 = vmatpush1.bf16.msra.mxu0 %v1443
    %2055 = vmatprep.subr.bf16.mxu0 0
    %2056 = vmatpush1.bf16.msra.mxu0 %v1444
    %2057 = vmatprep.subr.bf16.mxu0 0
    %2058 = vmatpush1.bf16.msra.mxu0 %v1445
    %2059 = vmatprep.subr.bf16.mxu0 0
    %2060 = vmatpush1.bf16.msra.mxu0 %v1446
    %2061 = vmatprep.subr.bf16.mxu0 0
    %2062 = vmatpush1.bf16.msra.mxu0 %v1447
    %2063 = vmatprep.subr.bf16.mxu0 0
    %2064 = vmatpush1.bf16.msra.mxu0 %v1448
    %2065 = vmatprep.mubr.bf16.mxu0 %v492
    %2066 = vmatmul.mubr.bf16.gmra.mrb[0].mxu0 %v491
    %v2067 = vpop.f32.mrb[0].mxu0
    %v2068 = vadd.f32 %v2028, %v2067
    %v2069 = vpop.f32.mrb[0].mxu0
    %v2070 = vpop.f32.mrb[0].mxu0
    %v2071 = vpop.f32.mrb[0].mxu0
    %2072 = vdwg.mxu0
    %2073 = vmatprep.subr.bf16.mxu0 0
    %2074 = vmatpush1.bf16.msra.mxu0 %v1449
    %2075 = vmatprep.subr.bf16.mxu0 0
    %2076 = vmatpush1.bf16.msra.mxu0 %v1450
    %2077 = vmatprep.subr.bf16.mxu0 0
    %2078 = vmatpush1.bf16.msra.mxu0 %v1451
    %2079 = vmatprep.subr.bf16.mxu0 0
    %2080 = vmatpush1.bf16.msra.mxu0 %v1452
    %2081 = vmatprep.subr.bf16.mxu0 0
    %2082 = vmatpush1.bf16.msra.mxu0 %v1453
    %2083 = vmatprep.subr.bf16.mxu0 0
    %2084 = vmatpush1.bf16.msra.mxu0 %v1454
    %2085 = vmatprep.subr.bf16.mxu0 0
    %2086 = vmatpush1.bf16.msra.mxu0 %v1455
    %2087 = vmatprep.subr.bf16.mxu0 0
    %2088 = vmatpush1.bf16.msra.mxu0 %v1456
    %2089 = vmatprep.subr.bf16.mxu0 0
    %2090 = vmatpush1.bf16.msra.mxu0 %v1457
    %2091 = vmatprep.subr.bf16.mxu0 0
    %2092 = vmatpush1.bf16.msra.mxu0 %v1458
    %2093 = vmatprep.subr.bf16.mxu0 0
    %2094 = vmatpush1.bf16.msra.mxu0 %v1459
    %2095 = vmatprep.subr.bf16.mxu0 0
    %2096 = vmatpush1.bf16.msra.mxu0 %v1460
    %2097 = vmatprep.subr.bf16.mxu0 0
    %2098 = vmatpush1.bf16.msra.mxu0 %v1461
    %2099 = vmatprep.subr.bf16.mxu0 0
    %2100 = vmatpush1.bf16.msra.mxu0 %v1462
    %2101 = vmatprep.subr.bf16.mxu0 0
    %2102 = vmatpush1.bf16.msra.mxu0 %v1463
    %2103 = vmatprep.subr.bf16.mxu0 0
    %2104 = vmatpush1.bf16.msra.mxu0 %v1464
    %2105 = vmatprep.mubr.bf16.mxu0 %v494
    %2106 = vmatmul.mubr.bf16.gmra.mrb[0].mxu0 %v493
    %v2107 = vpop.f32.mrb[0].mxu0
    %v2108 = vadd.f32 %v2068, %v2107
    %v2109 = vpop.f32.mrb[0].mxu0
    %v2110 = vpop.f32.mrb[0].mxu0
    %v2111 = vpop.f32.mrb[0].mxu0
    %2112 = vdwg.mxu0
    %2113 = vmatprep.subr.bf16.mxu0 0
    %2114 = vmatpush1.bf16.msra.mxu0 %v1465
    %2115 = vmatprep.subr.bf16.mxu0 0
    %2116 = vmatpush1.bf16.msra.mxu0 %v1466
    %2117 = vmatprep.subr.bf16.mxu0 0
    %2118 = vmatpush1.bf16.msra.mxu0 %v1467
    %2119 = vmatprep.subr.bf16.mxu0 0
    %2120 = vmatpush1.bf16.msra.mxu0 %v1468
    %2121 = vmatprep.subr.bf16.mxu0 0
    %2122 = vmatpush1.bf16.msra.mxu0 %v1469
    %2123 = vmatprep.subr.bf16.mxu0 0
    %2124 = vmatpush1.bf16.msra.mxu0 %v1470
    %2125 = vmatprep.subr.bf16.mxu0 0
    %2126 = vmatpush1.bf16.msra.mxu0 %v1471
    %2127 = vmatprep.subr.bf16.mxu0 0
    %2128 = vmatpush1.bf16.msra.mxu0 %v1472
    %2129 = vmatprep.subr.bf16.mxu0 0
    %2130 = vmatpush1.bf16.msra.mxu0 %v1473
    %2131 = vmatprep.subr.bf16.mxu0 0
    %2132 = vmatpush1.bf16.msra.mxu0 %v1474
    %2133 = vmatprep.subr.bf16.mxu0 0
    %2134 = vmatpush1.bf16.msra.mxu0 %v1475
    %2135 = vmatprep.subr.bf16.mxu0 0
    %2136 = vmatpush1.bf16.msra.mxu0 %v1476
    %2137 = vmatprep.subr.bf16.mxu0 0
    %2138 = vmatpush1.bf16.msra.mxu0 %v1477
    %2139 = vmatprep.subr.bf16.mxu0 0
    %2140 = vmatpush1.bf16.msra.mxu0 %v1478
    %2141 = vmatprep.subr.bf16.mxu0 0
    %2142 = vmatpush1.bf16.msra.mxu0 %v1479
    %2143 = vmatprep.subr.bf16.mxu0 0
    %2144 = vmatpush1.bf16.msra.mxu0 %v1480
    %2145 = vmatprep.mubr.bf16.mxu0 %v496
    %2146 = vmatmul.mubr.bf16.gmra.mrb[0].mxu0 %v495
    %v2147 = vpop.f32.mrb[0].mxu0
    %v2148 = vadd.f32 %v2108, %v2147
    %v2149 = vpop.f32.mrb[0].mxu0
    %v2150 = vpop.f32.mrb[0].mxu0
    %v2151 = vpop.f32.mrb[0].mxu0
    %2152 = vdwg.mxu0
    %v2153 = vmax.f32 %v2148, 0.0
    %v2154 = vpack.c.bf16 %v2153, %v2153
    %v2155 = vld [vmem:[%s3] sm:$0xf]
    %v2156 = vld [vmem:[%s3 + $0x4] sm:$0xf]
    %v2157 = vld [vmem:[%s3 + $0x8] sm:$0xf]
    %v2158 = vld [vmem:[%s3 + $0xc] sm:$0xf]
    %v2159 = vld [vmem:[%s3 + $0x10] sm:$0xf]
    %v2160 = vld [vmem:[%s3 + $0x14] sm:$0xf]
    %v2161 = vld [vmem:[%s3 + $0x18] sm:$0xf]
    %v2162 = vld [vmem:[%s3 + $0x1c] sm:$0xf]
    %v2163 = vld [vmem:[%s4] sm:$0x1]
    %v2165 = vlaneseq
    %v2166 = vshrl.u32 %v2165, 7
    %v2167 = vsub.s32 0, %v2166
    %v2168 = vrot.slane %v2163, %v2167
    %v2178 = vunpack.c.l.b16 %v2155
    %v2179 = vunpack.c.l.b16 %v2156
    %v2180 = vunpack.c.l.b16 %v2157
    %v2181 = vunpack.c.l.b16 %v2158
    %v2182 = vunpack.c.l.b16 %v2159
    %v2183 = vunpack.c.l.b16 %v2160
    %v2184 = vunpack.c.l.b16 %v2161
    %v2185 = vunpack.c.l.b16 %v2162
    %v2186 = vpack.c.b16 %v2179, %v2178
    %v2187 = vpack.c.b16 %v2181, %v2180
    %v2188 = vpack.c.b16 %v2183, %v2182
    %v2189 = vpack.c.b16 %v2185, %v2184
    %vm2194 = vcmask 523264
    %v2196 = vsel %vm2194, %v2154, 0
    %2198 = vmatprep.subr.bf16.mxu0 0
    %2199 = vmatpush1.bf16.msra.mxu0 %v2186
    %2200 = vmatprep.subr.bf16.mxu0 0
    %2201 = vmatpush1.bf16.msra.mxu0 %v2187
    %2202 = vmatprep.subr.bf16.mxu0 0
    %2203 = vmatpush1.bf16.msra.mxu0 %v2188
    %2204 = vmatprep.subr.bf16.mxu0 0
    %2205 = vmatpush1.bf16.msra.mxu0 %v2189
    %2206 = vmatprep.subr.bf16.mxu0 0
    %2207 = vmatpush1.bf16.msra.mxu0 0
    %2208 = vmatprep.subr.bf16.mxu0 0
    %2209 = vmatpush1.bf16.msra.mxu0 0
    %2210 = vmatprep.subr.bf16.mxu0 0
    %2211 = vmatpush1.bf16.msra.mxu0 0
    %2212 = vmatprep.subr.bf16.mxu0 0
    %2213 = vmatpush1.bf16.msra.mxu0 0
    %2214 = vmatprep.subr.bf16.mxu0 0
    %2215 = vmatpush1.bf16.msra.mxu0 0
    %2216 = vmatprep.subr.bf16.mxu0 0
    %2217 = vmatpush1.bf16.msra.mxu0 0
    %2218 = vmatprep.subr.bf16.mxu0 0
    %2219 = vmatpush1.bf16.msra.mxu0 0
    %2220 = vmatprep.subr.bf16.mxu0 0
    %2221 = vmatpush1.bf16.msra.mxu0 0
    %2222 = vmatprep.subr.bf16.mxu0 0
    %2223 = vmatpush1.bf16.msra.mxu0 0
    %2224 = vmatprep.subr.bf16.mxu0 0
    %2225 = vmatpush1.bf16.msra.mxu0 0
    %2226 = vmatprep.subr.bf16.mxu0 0
    %2227 = vmatpush1.bf16.msra.mxu0 0
    %2228 = vmatprep.subr.bf16.mxu0 0
    %2229 = vmatpush1.bf16.msra.mxu0 0
    %2230 = vmatprep.mubr.bf16.mxu0 0
    %2231 = vmatmul.mubr.bf16.gmra.mrb[0].mxu0 %v2196
    %v2232 = vpop.f32.mrb[0].mxu0
    %v2233 = vadd.f32 %v2168, %v2232
    %v2234 = vpop.f32.mrb[0].mxu0
    %v2235 = vpop.f32.mrb[0].mxu0
    %v2236 = vpop.f32.mrb[0].mxu0
    %2237 = vdwg.mxu0
    %v2238 = vmax.f32 %v2233, 0.0
    %v2239 = vpack.c.bf16 %v2238, %v2238
    %v2240 = vld [vmem:[%s5] sm:$0xf]
    %v2241 = vld [vmem:[%s5 + $0x4] sm:$0xf]
    %v2242 = vld [vmem:[%s5 + $0x8] sm:$0xf]
    %v2243 = vld [vmem:[%s5 + $0xc] sm:$0xf]
    %v2244 = vld [vmem:[%s6] sm:$0x1]
    %v2246 = vlaneseq
    %v2247 = vshrl.u32 %v2246, 7
    %v2248 = vsub.s32 0, %v2247
    %v2249 = vrot.slane %v2244, %v2248
    %v2255 = vunpack.c.l.b16 %v2240
    %v2256 = vunpack.c.l.b16 %v2241
    %v2257 = vunpack.c.l.b16 %v2242
    %v2258 = vunpack.c.l.b16 %v2243
    %v2259 = vpack.c.b16 %v2256, %v2255
    %v2260 = vpack.c.b16 %v2258, %v2257
    %vm2263 = vcmask 261120
    %v2265 = vsel %vm2263, %v2239, 0
    %2267 = vmatprep.subr.bf16.mxu0 0
    %2268 = vmatpush1.bf16.msra.mxu0 %v2259
    %2269 = vmatprep.subr.bf16.mxu0 0
    %2270 = vmatpush1.bf16.msra.mxu0 %v2260
    %2271 = vmatprep.subr.bf16.mxu0 0
    %2272 = vmatpush1.bf16.msra.mxu0 0
    %2273 = vmatprep.subr.bf16.mxu0 0
    %2274 = vmatpush1.bf16.msra.mxu0 0
    %2275 = vmatprep.subr.bf16.mxu0 0
    %2276 = vmatpush1.bf16.msra.mxu0 0
    %2277 = vmatprep.subr.bf16.mxu0 0
    %2278 = vmatpush1.bf16.msra.mxu0 0
    %2279 = vmatprep.subr.bf16.mxu0 0
    %2280 = vmatpush1.bf16.msra.mxu0 0
    %2281 = vmatprep.subr.bf16.mxu0 0
    %2282 = vmatpush1.bf16.msra.mxu0 0
    %2283 = vmatprep.subr.bf16.mxu0 0
    %2284 = vmatpush1.bf16.msra.mxu0 0
    %2285 = vmatprep.subr.bf16.mxu0 0
    %2286 = vmatpush1.bf16.msra.mxu0 0
    %2287 = vmatprep.subr.bf16.mxu0 0
    %2288 = vmatpush1.bf16.msra.mxu0 0
    %2289 = vmatprep.subr.bf16.mxu0 0
    %2290 = vmatpush1.bf16.msra.mxu0 0
    %2291 = vmatprep.subr.bf16.mxu0 0
    %2292 = vmatpush1.bf16.msra.mxu0 0
    %2293 = vmatprep.subr.bf16.mxu0 0
    %2294 = vmatpush1.bf16.msra.mxu0 0
    %2295 = vmatprep.subr.bf16.mxu0 0
    %2296 = vmatpush1.bf16.msra.mxu0 0
    %2297 = vmatprep.subr.bf16.mxu0 0
    %2298 = vmatpush1.bf16.msra.mxu0 0
    %2299 = vmatprep.mubr.bf16.mxu0 0
    %2300 = vmatmul.mubr.bf16.gmra.mrb[0].mxu0 %v2265
    %v2301 = vpop.f32.mrb[0].mxu0
    %v2302 = vadd.f32 %v2249, %v2301
    %v2303 = vpop.f32.mrb[0].mxu0
    %v2304 = vpop.f32.mrb[0].mxu0
    %v2305 = vpop.f32.mrb[0].mxu0
    %2306 = vdwg.mxu0
    %v2307 = vmax.f32 %v2302, 0.0
    %v2308 = vpack.c.bf16 %v2307, %v2307
    %v2309 = vld [vmem:[%s7] sm:$0xf]
    %v2310 = vld [vmem:[%s7 + $0x4] sm:$0xf]
    %v2311 = vld [vmem:[%s8] sm:$0x1]
    %v2313 = vlaneseq
    %v2314 = vshrl.u32 %v2313, 7
    %v2315 = vsub.s32 0, %v2314
    %v2316 = vrot.slane %v2311, %v2315
    %v2320 = vunpack.c.l.b16 %v2309
    %v2321 = vunpack.c.l.b16 %v2310
    %v2322 = vpack.c.b16 %v2321, %v2320
    %vm2324 = vcmask 130048
    %v2326 = vsel %vm2324, %v2308, 0
    %2328 = vmatprep.subr.bf16.mxu0 0
    %2329 = vmatpush1.bf16.msra.mxu0 %v2322
    %2330 = vmatprep.subr.bf16.mxu0 0
    %2331 = vmatpush1.bf16.msra.mxu0 0
    %2332 = vmatprep.subr.bf16.mxu0 0
    %2333 = vmatpush1.bf16.msra.mxu0 0
    %2334 = vmatprep.subr.bf16.mxu0 0
    %2335 = vmatpush1.bf16.msra.mxu0 0
    %2336 = vmatprep.subr.bf16.mxu0 0
    %2337 = vmatpush1.bf16.msra.mxu0 0
    %2338 = vmatprep.subr.bf16.mxu0 0
    %2339 = vmatpush1.bf16.msra.mxu0 0
    %2340 = vmatprep.subr.bf16.mxu0 0
    %2341 = vmatpush1.bf16.msra.mxu0 0
    %2342 = vmatprep.subr.bf16.mxu0 0
    %2343 = vmatpush1.bf16.msra.mxu0 0
    %2344 = vmatprep.subr.bf16.mxu0 0
    %2345 = vmatpush1.bf16.msra.mxu0 0
    %2346 = vmatprep.subr.bf16.mxu0 0
    %2347 = vmatpush1.bf16.msra.mxu0 0
    %2348 = vmatprep.subr.bf16.mxu0 0
    %2349 = vmatpush1.bf16.msra.mxu0 0
    %2350 = vmatprep.subr.bf16.mxu0 0
    %2351 = vmatpush1.bf16.msra.mxu0 0
    %2352 = vmatprep.subr.bf16.mxu0 0
    %2353 = vmatpush1.bf16.msra.mxu0 0
    %2354 = vmatprep.subr.bf16.mxu0 0
    %2355 = vmatpush1.bf16.msra.mxu0 0
    %2356 = vmatprep.subr.bf16.mxu0 0
    %2357 = vmatpush1.bf16.msra.mxu0 0
    %2358 = vmatprep.subr.bf16.mxu0 0
    %2359 = vmatpush1.bf16.msra.mxu0 0
    %2360 = vmatprep.mubr.bf16.mxu0 0
    %2361 = vmatmul.mubr.bf16.gmra.mrb[0].mxu0 %v2326
    %v2362 = vpop.f32.mrb[0].mxu0
    %v2363 = vadd.f32 %v2316, %v2362
    %v2364 = vpop.f32.mrb[0].mxu0
    %v2365 = vpop.f32.mrb[0].mxu0
    %v2366 = vpop.f32.mrb[0].mxu0
    %2367 = vdwg.mxu0
    %2368 = vst [vmem:[#allocation2] sm:$0xff] %v2363
    // Predicated region
    $region38: #{tpu_custom_call.1} parent=1 // pred_check
      _
    $region39: #{tpu_custom_call.1} parent=1 // pred_check_branch
      %2370 = sbr.rel (0) target = $region41
    $region40: #{tpu_custom_call.1} parent=1 // pred_region
      %s2372 = ssub.s32 128, 128
      %2373 = vsyncadd [#allocation3], %s2372
      %s2375 = sshll.u32 [#allocation2], 4
      %s2376 = int_to_ptr.vmem [resolvable:$true] %s2375
      %2378 = dma.vmem_to_hbm [thread:$0]  %s2376, 128, %s9, [#allocation3]
    $region41: #{tpu_custom_call.1} parent=1 // pred_fallthru
      _
    // Predicated region
    $region42: #{tpu_custom_call.1} parent=1 // pred_check
      _
    $region43: #{tpu_custom_call.1} parent=1 // pred_check_branch
      %2380 = sbr.rel (0) target = $region45
    $region44: #{tpu_custom_call.1} parent=1 // pred_region
      %2381 = dma.done [#allocation3], 128
    $region45: #{tpu_custom_call.1} parent=1 // pred_fallthru
      _
    %2382 = vsyncpa [#allocation3], 1

</llo_original>
